<compile_context>
chip_gen: v5e
topology: v5e:2x2
jax: 0.10.0
libtpu: 0.0.40
codegen_flags: <defaults>
</compile_context>

<pallas_src>
import jax
import jax.numpy as jnp
import numpy as np
from jax.experimental import pallas as pl
from jax.experimental.pallas import tpu as pltpu

INPUT_DIM = 6
D_MODEL = 32
NLAYERS = 2
GATE_WIDTH = 128          # 3*H = 96 padded to a full 128-lane vreg


def _sigmoid_fast(x):
    # sigmoid(x) == 0.5*(tanh(x/2)+1): single EUP op, keeps the divide off VALU
    return 0.5 * (jnp.tanh(0.5 * x) + 1.0)


def _sigmoid_exact(x):
    return 1.0 / (1.0 + jnp.exp(-x))


# --------------------------------- kernel ---------------------------------- #
def gru_kernel(x_ref, wi0_ref, wi1_ref, wh_ref, bif_ref, bhn_ref, out_ref):
    S, TB, IN = x_ref.shape
    H = D_MODEL

    # layer-0 input rows, flattened time-major for the fused bulk projection
    inp_flat = x_ref[...].reshape(S * TB, IN)                    # (S*TB, 6)

    h = None
    for l in range(NLAYERS):
        wi_f = wi0_ref[...] if l == 0 else wi1_ref[...]          # (K, 128)
        wh_f = wh_ref[l]                                         # (32, 128)

        # ---- non-recurrent part: ONE fused matmul for all timesteps ----
        # bif already contains b_i{r,z,n} with b_hr / b_hz folded in.
        g_all = jnp.dot(inp_flat, wi_f,
                        preferred_element_type=jnp.float32) + bif_ref[l]   # (S*TB, 128)

        # hoist the (TB, H) broadcast of b_hn out of the unrolled time loop
        bhn_b = jnp.broadcast_to(bhn_ref[l], (TB, H))

        # ---- recurrent part: static unroll over time (h0 == 0 per layer) ----
        hs = []
        for t in range(S):
            g_t = g_all[t * TB:(t + 1) * TB]                     # static sublane slice
            g_r = g_t[:, 0:H]
            g_z = g_t[:, H:2 * H]
            g_n = g_t[:, 2 * H:3 * H]
            if t == 0:
                # h_{-1} == 0  =>  the recurrent matmul result is exactly zero
                r = _sigmoid_fast(g_r)
                z = _sigmoid_fast(g_z)
                n = jnp.tanh(g_n + r * bhn_b)
                h = (1.0 - z) * n
            else:
                # ONE fused (TB,32)@(32,128) matmul per step on the serial path
                hg = jnp.dot(h, wh_f, preferred_element_type=jnp.float32)   # (TB, 128)
                r = _sigmoid_fast(g_r + hg[:, 0:H])
                z = _sigmoid_fast(g_z + hg[:, H:2 * H])
                n = jnp.tanh(g_n + r * (hg[:, 2 * H:3 * H] + bhn_b))
                h = (1.0 - z) * n + z * h
            if l < NLAYERS - 1:
                hs.append(h)

        if l < NLAYERS - 1:
            # next layer's input, already in flattened time-major order
            inp_flat = jnp.concatenate(hs, axis=0)               # (S*TB, 32)

    out_ref[...] = h                                             # (TB, H): last step, last layer


# -------------------------------- wrapper ----------------------------------- #
def _pick_batch_tile(B):
    """One grid step by default (v5e/v6e: single TC, extra steps are pure
    overhead on this latency-bound kernel); exactly two steps when the device
    has >= 2 cores (v7x megacore) and B/2 is a legal (multiple-of-8) tile."""
    num_cores = getattr(jax.devices()[0], "num_cores", 1) or 1
    if num_cores >= 2 and B % 2 == 0 and (B // 2) % 8 == 0:
        return B // 2
    return B


def gru_encoder(x, params):
    B, S, IN = x.shape
    H = D_MODEL
    GW = GATE_WIDTH
    TB = _pick_batch_tile(B)
    assert B % TB == 0

    # wrapper-side layout plumbing (cheap XLA ops, outside the kernel):
    # time-major x, NO feature padding (the padding lives on the weight side).
    x_t = jnp.transpose(x.astype(jnp.float32), (1, 0, 2))        # (S, B, 6)

    def fuse_wi(w):                                              # (3, K, H) -> (K, 128)
        K = w.shape[1]
        out = jnp.zeros((K, GW), jnp.float32)
        for g in range(3):
            out = out.at[:, g * H:(g + 1) * H].set(w[g])
        return out

    wi0_f = fuse_wi(params["wi0"])                               # (6, 128)
    wi1_f = fuse_wi(params["wi1"])                               # (32, 128)

    wh_f = jnp.zeros((NLAYERS, H, GW), jnp.float32)
    bi_f = jnp.zeros((NLAYERS, 1, GW), jnp.float32)
    bhn = jnp.zeros((NLAYERS, 1, H), jnp.float32)
    for l in range(NLAYERS):
        for g in range(3):
            wh_f = wh_f.at[l, :, g * H:(g + 1) * H].set(params["wh"][l, g])
        # fold b_hr / b_hz into the precomputed input-side gate biases
        bi_f = bi_f.at[l, 0, 0 * H:1 * H].set(params["bi"][l, 0] + params["bh"][l, 0])
        bi_f = bi_f.at[l, 0, 1 * H:2 * H].set(params["bi"][l, 1] + params["bh"][l, 1])
        bi_f = bi_f.at[l, 0, 2 * H:3 * H].set(params["bi"][l, 2])
        bhn = bhn.at[l, 0].set(params["bh"][l, 2])               # cannot fold (multiplied by r)

    args = (x_t, wi0_f, wi1_f, wh_f, bi_f, bhn)

    def full_spec(a):
        nd = a.ndim
        return pl.BlockSpec(a.shape, lambda b, _nd=nd: (0,) * _nd)

    in_specs = [pl.BlockSpec((S, TB, IN), lambda b: (0, b, 0))] + \
               [full_spec(a) for a in args[1:]]
    out_specs = pl.BlockSpec((TB, H), lambda b: (b, 0))

    return pl.pallas_call(
        gru_kernel,
        out_shape=jax.ShapeDtypeStruct((B, H), jnp.float32),
        grid_spec=pltpu.PrefetchScalarGridSpec(
            num_scalar_prefetch=0,
            grid=(B // TB,),
            in_specs=in_specs,
            out_specs=out_specs,
        ),
        compiler_params=pltpu.CompilerParams(dimension_semantics=("parallel",)),
    )(*args)


# --------------------------- parameter construction ------------------------- #
def init_params(key):
    ks = jax.random.split(key, 5)
    scale = 1.0 / np.sqrt(D_MODEL)     # ~ PyTorch GRU's U(-1/sqrt(H), 1/sqrt(H))

    def w(k, shape):
        return jax.random.uniform(k, shape, jnp.float32, -scale, scale)

    return dict(
        wi0=w(ks[0], (3, INPUT_DIM, D_MODEL)),        # layer-0 W_i{r,z,n}^T
        wi1=w(ks[1], (3, D_MODEL, D_MODEL)),          # layer-1 W_i{r,z,n}^T
        wh=w(ks[2], (NLAYERS, 3, D_MODEL, D_MODEL)),  # W_h{r,z,n}^T per layer
        bi=w(ks[3], (NLAYERS, 3, D_MODEL)),
        bh=w(ks[4], (NLAYERS, 3, D_MODEL)),
    )


# ----------------------------- pure-JAX reference --------------------------- #
def reference(x, p):
    # PyTorch GRU semantics (eval mode, h0 = 0, gate order r, z, n):
    #   r = sig(W_ir x + b_ir + W_hr h + b_hr)
    #   z = sig(W_iz x + b_iz + W_hz h + b_hz)
    #   n = tanh(W_in x + b_in + r * (W_hn h + b_hn))
    #   h = (1 - z) * n + z * h
    # TODO(synk): inter-layer dropout (train-mode only) is intentionally omitted.
    B, S, _ = x.shape
    H = D_MODEL
    inp = x.astype(jnp.float32)
    for l in range(NLAYERS):
        wi = p["wi0"] if l == 0 else p["wi1"]
        wh, bi, bh = p["wh"][l], p["bi"][l], p["bh"][l]
        h = jnp.zeros((B, H), jnp.float32)
        outs = []
        for t in range(S):
            xt = inp[:, t, :]
            r = _sigmoid_exact(xt @ wi[0] + bi[0] + h @ wh[0] + bh[0])
            z = _sigmoid_exact(xt @ wi[1] + bi[1] + h @ wh[1] + bh[1])
            n = jnp.tanh(xt @ wi[2] + bi[2] + r * (h @ wh[2] + bh[2]))
            h = (1.0 - z) * n + z * h
            outs.append(h)
        inp = jnp.stack(outs, axis=1)
    return inp[:, -1, :]


# ----------------------------------- main ------------------------------------ #
if __name__ == "__main__":
    key = jax.random.PRNGKey(0)
    k_param, k_x1, k_x2 = jax.random.split(key, 3)
    params = init_params(k_param)

    # small spec-consistent shapes: batch=2, seq=8, input_dim=6, hidden=32
    x = jax.random.normal(k_x1, (2, 8, INPUT_DIM), jnp.float32)
    out = jax.block_until_ready(gru_encoder(x, params))
    ref = jax.block_until_ready(reference(x, params))
    assert out.shape == (2, D_MODEL)
    np.testing.assert_allclose(np.asarray(out), np.asarray(ref), rtol=1e-4, atol=1e-4)

    # a second asymmetric case to exercise the batch-tiled (possibly 2-step) grid
    x2 = jax.random.normal(k_x2, (16, 8, INPUT_DIM), jnp.float32)
    out2 = jax.block_until_ready(gru_encoder(x2, params))
    ref2 = jax.block_until_ready(reference(x2, params))
    np.testing.assert_allclose(np.asarray(out2), np.asarray(ref2), rtol=1e-4, atol=1e-4)

    print("KERNEL_OK")
</pallas_src>

<mosaic_0001>
module attributes {stable_mosaic.version = 11 : i64} {
  func.func @gru_kernel(%arg0: i32, %arg1: memref<8x2x6xf32, #tpu.memory_space<vmem>>, %arg2: memref<6x128xf32, #tpu.memory_space<vmem>>, %arg3: memref<32x128xf32, #tpu.memory_space<vmem>>, %arg4: memref<2x32x128xf32, #tpu.memory_space<vmem>>, %arg5: memref<2x1x128xf32, #tpu.memory_space<vmem>>, %arg6: memref<2x1x32xf32, #tpu.memory_space<vmem>>, %arg7: memref<2x32xf32, #tpu.memory_space<vmem>>) attributes {dimension_semantics = [#tpu.dimension_semantics<parallel>], iteration_bounds = array<i64: 1>, scalar_prefetch = 0 : i64, scratch_operands = 0 : i64, tpu.core_type = #tpu.core_type<tc>, window_params = [{transform_indices = @transform_0, window_bounds = array<i64: 8, 2, 6>}, {pipeline_mode = #tpu.pipeline_mode<synchronous>, transform_indices = @transform_1, window_bounds = array<i64: 6, 128>}, {pipeline_mode = #tpu.pipeline_mode<synchronous>, transform_indices = @transform_2, window_bounds = array<i64: 32, 128>}, {pipeline_mode = #tpu.pipeline_mode<synchronous>, transform_indices = @transform_3, window_bounds = array<i64: 2, 32, 128>}, {pipeline_mode = #tpu.pipeline_mode<synchronous>, transform_indices = @transform_4, window_bounds = array<i64: 2, 1, 128>}, {pipeline_mode = #tpu.pipeline_mode<synchronous>, transform_indices = @transform_5, window_bounds = array<i64: 2, 1, 32>}, {transform_indices = @transform_6, window_bounds = array<i64: 2, 32>}]} {
    %c0 = arith.constant 0 : index
    %c0_0 = arith.constant 0 : index
    %c0_1 = arith.constant 0 : index
    %0 = vector.load %arg1[%c0, %c0_0, %c0_1] : memref<8x2x6xf32, #tpu.memory_space<vmem>>, vector<8x2x6xf32>
    %1 = vector.shape_cast %0 : vector<8x2x6xf32> to vector<16x6xf32>
    %c0_2 = arith.constant 0 : index
    %c0_3 = arith.constant 0 : index
    %2 = vector.load %arg2[%c0_2, %c0_3] : memref<6x128xf32, #tpu.memory_space<vmem>>, vector<6x128xf32>
    %c0_4 = arith.constant 0 : index
    %c0_5 = arith.constant 0 : index
    %c0_6 = arith.constant 0 : index
    %3 = vector.load %arg4[%c0_4, %c0_5, %c0_6] : memref<2x32x128xf32, #tpu.memory_space<vmem>>, vector<1x32x128xf32>
    %4 = vector.shape_cast %3 : vector<1x32x128xf32> to vector<32x128xf32>
    %cst = arith.constant dense<0.000000e+00> : vector<16x128xf32>
    %5 = tpu.matmul %1, %2, %cst {dimension_numbers = #tpu.dot_dimension_numbers<[1], [0], [0], [1], [0, 0, 1, 1], [], []>} : vector<16x6xf32>, vector<6x128xf32>, vector<16x128xf32> -> vector<16x128xf32>
    %c0_7 = arith.constant 0 : index
    %c0_8 = arith.constant 0 : index
    %c0_9 = arith.constant 0 : index
    %6 = vector.load %arg5[%c0_7, %c0_8, %c0_9] : memref<2x1x128xf32, #tpu.memory_space<vmem>>, vector<1x1x128xf32>
    %7 = vector.shape_cast %6 : vector<1x1x128xf32> to vector<1x128xf32>
    %8 = vector.broadcast %7 : vector<1x128xf32> to vector<16x128xf32>
    %9 = arith.addf %5, %8 : vector<16x128xf32>
    %c0_10 = arith.constant 0 : index
    %c0_11 = arith.constant 0 : index
    %c0_12 = arith.constant 0 : index
    %10 = vector.load %arg6[%c0_10, %c0_11, %c0_12] : memref<2x1x32xf32, #tpu.memory_space<vmem>>, vector<1x1x32xf32>
    %11 = vector.shape_cast %10 : vector<1x1x32xf32> to vector<1x32xf32>
    %12 = vector.shape_cast %11 : vector<1x32xf32> to vector<1x32xf32>
    %13 = vector.broadcast %12 : vector<1x32xf32> to vector<2x32xf32>
    %14 = vector.extract_strided_slice %9 {offsets = [0, 0], sizes = [2, 128], strides = [1, 1]} : vector<16x128xf32> to vector<2x128xf32>
    %15 = vector.extract_strided_slice %14 {offsets = [0, 0], sizes = [2, 32], strides = [1, 1]} : vector<2x128xf32> to vector<2x32xf32>
    %16 = vector.extract_strided_slice %14 {offsets = [0, 32], sizes = [2, 32], strides = [1, 1]} : vector<2x128xf32> to vector<2x32xf32>
    %17 = vector.extract_strided_slice %14 {offsets = [0, 64], sizes = [2, 32], strides = [1, 1]} : vector<2x128xf32> to vector<2x32xf32>
    %cst_13 = arith.constant 5.000000e-01 : f32
    %18 = vector.broadcast %cst_13 : f32 to vector<2x32xf32>
    %19 = arith.mulf %18, %15 : vector<2x32xf32>
    %20 = math.tanh %19 : vector<2x32xf32>
    %cst_14 = arith.constant 1.000000e+00 : f32
    %21 = vector.broadcast %cst_14 : f32 to vector<2x32xf32>
    %22 = arith.addf %20, %21 : vector<2x32xf32>
    %cst_15 = arith.constant 5.000000e-01 : f32
    %23 = vector.broadcast %cst_15 : f32 to vector<2x32xf32>
    %24 = arith.mulf %23, %22 : vector<2x32xf32>
    %cst_16 = arith.constant 5.000000e-01 : f32
    %25 = vector.broadcast %cst_16 : f32 to vector<2x32xf32>
    %26 = arith.mulf %25, %16 : vector<2x32xf32>
    %27 = math.tanh %26 : vector<2x32xf32>
    %cst_17 = arith.constant 1.000000e+00 : f32
    %28 = vector.broadcast %cst_17 : f32 to vector<2x32xf32>
    %29 = arith.addf %27, %28 : vector<2x32xf32>
    %cst_18 = arith.constant 5.000000e-01 : f32
    %30 = vector.broadcast %cst_18 : f32 to vector<2x32xf32>
    %31 = arith.mulf %30, %29 : vector<2x32xf32>
    %32 = arith.mulf %24, %13 : vector<2x32xf32>
    %33 = arith.addf %17, %32 : vector<2x32xf32>
    %34 = math.tanh %33 : vector<2x32xf32>
    %cst_19 = arith.constant 1.000000e+00 : f32
    %35 = vector.broadcast %cst_19 : f32 to vector<2x32xf32>
    %36 = arith.subf %35, %31 : vector<2x32xf32>
    %37 = arith.mulf %36, %34 : vector<2x32xf32>
    %38 = vector.extract_strided_slice %9 {offsets = [2, 0], sizes = [2, 128], strides = [1, 1]} : vector<16x128xf32> to vector<2x128xf32>
    %39 = vector.extract_strided_slice %38 {offsets = [0, 0], sizes = [2, 32], strides = [1, 1]} : vector<2x128xf32> to vector<2x32xf32>
    %40 = vector.extract_strided_slice %38 {offsets = [0, 32], sizes = [2, 32], strides = [1, 1]} : vector<2x128xf32> to vector<2x32xf32>
    %41 = vector.extract_strided_slice %38 {offsets = [0, 64], sizes = [2, 32], strides = [1, 1]} : vector<2x128xf32> to vector<2x32xf32>
    %cst_20 = arith.constant dense<0.000000e+00> : vector<2x128xf32>
    %42 = tpu.matmul %37, %4, %cst_20 {dimension_numbers = #tpu.dot_dimension_numbers<[1], [0], [0], [1], [0, 0, 1, 1], [], []>} : vector<2x32xf32>, vector<32x128xf32>, vector<2x128xf32> -> vector<2x128xf32>
    %43 = vector.extract_strided_slice %42 {offsets = [0, 0], sizes = [2, 32], strides = [1, 1]} : vector<2x128xf32> to vector<2x32xf32>
    %44 = arith.addf %39, %43 : vector<2x32xf32>
    %cst_21 = arith.constant 5.000000e-01 : f32
    %45 = vector.broadcast %cst_21 : f32 to vector<2x32xf32>
    %46 = arith.mulf %45, %44 : vector<2x32xf32>
    %47 = math.tanh %46 : vector<2x32xf32>
    %cst_22 = arith.constant 1.000000e+00 : f32
    %48 = vector.broadcast %cst_22 : f32 to vector<2x32xf32>
    %49 = arith.addf %47, %48 : vector<2x32xf32>
    %cst_23 = arith.constant 5.000000e-01 : f32
    %50 = vector.broadcast %cst_23 : f32 to vector<2x32xf32>
    %51 = arith.mulf %50, %49 : vector<2x32xf32>
    %52 = vector.extract_strided_slice %42 {offsets = [0, 32], sizes = [2, 32], strides = [1, 1]} : vector<2x128xf32> to vector<2x32xf32>
    %53 = arith.addf %40, %52 : vector<2x32xf32>
    %cst_24 = arith.constant 5.000000e-01 : f32
    %54 = vector.broadcast %cst_24 : f32 to vector<2x32xf32>
    %55 = arith.mulf %54, %53 : vector<2x32xf32>
    %56 = math.tanh %55 : vector<2x32xf32>
    %cst_25 = arith.constant 1.000000e+00 : f32
    %57 = vector.broadcast %cst_25 : f32 to vector<2x32xf32>
    %58 = arith.addf %56, %57 : vector<2x32xf32>
    %cst_26 = arith.constant 5.000000e-01 : f32
    %59 = vector.broadcast %cst_26 : f32 to vector<2x32xf32>
    %60 = arith.mulf %59, %58 : vector<2x32xf32>
    %61 = vector.extract_strided_slice %42 {offsets = [0, 64], sizes = [2, 32], strides = [1, 1]} : vector<2x128xf32> to vector<2x32xf32>
    %62 = arith.addf %61, %13 : vector<2x32xf32>
    %63 = arith.mulf %51, %62 : vector<2x32xf32>
    %64 = arith.addf %41, %63 : vector<2x32xf32>
    %65 = math.tanh %64 : vector<2x32xf32>
    %cst_27 = arith.constant 1.000000e+00 : f32
    %66 = vector.broadcast %cst_27 : f32 to vector<2x32xf32>
    %67 = arith.subf %66, %60 : vector<2x32xf32>
    %68 = arith.mulf %67, %65 : vector<2x32xf32>
    %69 = arith.mulf %60, %37 : vector<2x32xf32>
    %70 = arith.addf %68, %69 : vector<2x32xf32>
    %71 = vector.extract_strided_slice %9 {offsets = [4, 0], sizes = [2, 128], strides = [1, 1]} : vector<16x128xf32> to vector<2x128xf32>
    %72 = vector.extract_strided_slice %71 {offsets = [0, 0], sizes = [2, 32], strides = [1, 1]} : vector<2x128xf32> to vector<2x32xf32>
    %73 = vector.extract_strided_slice %71 {offsets = [0, 32], sizes = [2, 32], strides = [1, 1]} : vector<2x128xf32> to vector<2x32xf32>
    %74 = vector.extract_strided_slice %71 {offsets = [0, 64], sizes = [2, 32], strides = [1, 1]} : vector<2x128xf32> to vector<2x32xf32>
    %cst_28 = arith.constant dense<0.000000e+00> : vector<2x128xf32>
    %75 = tpu.matmul %70, %4, %cst_28 {dimension_numbers = #tpu.dot_dimension_numbers<[1], [0], [0], [1], [0, 0, 1, 1], [], []>} : vector<2x32xf32>, vector<32x128xf32>, vector<2x128xf32> -> vector<2x128xf32>
    %76 = vector.extract_strided_slice %75 {offsets = [0, 0], sizes = [2, 32], strides = [1, 1]} : vector<2x128xf32> to vector<2x32xf32>
    %77 = arith.addf %72, %76 : vector<2x32xf32>
    %cst_29 = arith.constant 5.000000e-01 : f32
    %78 = vector.broadcast %cst_29 : f32 to vector<2x32xf32>
    %79 = arith.mulf %78, %77 : vector<2x32xf32>
    %80 = math.tanh %79 : vector<2x32xf32>
    %cst_30 = arith.constant 1.000000e+00 : f32
    %81 = vector.broadcast %cst_30 : f32 to vector<2x32xf32>
    %82 = arith.addf %80, %81 : vector<2x32xf32>
    %cst_31 = arith.constant 5.000000e-01 : f32
    %83 = vector.broadcast %cst_31 : f32 to vector<2x32xf32>
    %84 = arith.mulf %83, %82 : vector<2x32xf32>
    %85 = vector.extract_strided_slice %75 {offsets = [0, 32], sizes = [2, 32], strides = [1, 1]} : vector<2x128xf32> to vector<2x32xf32>
    %86 = arith.addf %73, %85 : vector<2x32xf32>
    %cst_32 = arith.constant 5.000000e-01 : f32
    %87 = vector.broadcast %cst_32 : f32 to vector<2x32xf32>
    %88 = arith.mulf %87, %86 : vector<2x32xf32>
    %89 = math.tanh %88 : vector<2x32xf32>
    %cst_33 = arith.constant 1.000000e+00 : f32
    %90 = vector.broadcast %cst_33 : f32 to vector<2x32xf32>
    %91 = arith.addf %89, %90 : vector<2x32xf32>
    %cst_34 = arith.constant 5.000000e-01 : f32
    %92 = vector.broadcast %cst_34 : f32 to vector<2x32xf32>
    %93 = arith.mulf %92, %91 : vector<2x32xf32>
    %94 = vector.extract_strided_slice %75 {offsets = [0, 64], sizes = [2, 32], strides = [1, 1]} : vector<2x128xf32> to vector<2x32xf32>
    %95 = arith.addf %94, %13 : vector<2x32xf32>
    %96 = arith.mulf %84, %95 : vector<2x32xf32>
    %97 = arith.addf %74, %96 : vector<2x32xf32>
    %98 = math.tanh %97 : vector<2x32xf32>
    %cst_35 = arith.constant 1.000000e+00 : f32
    %99 = vector.broadcast %cst_35 : f32 to vector<2x32xf32>
    %100 = arith.subf %99, %93 : vector<2x32xf32>
    %101 = arith.mulf %100, %98 : vector<2x32xf32>
    %102 = arith.mulf %93, %70 : vector<2x32xf32>
    %103 = arith.addf %101, %102 : vector<2x32xf32>
    %104 = vector.extract_strided_slice %9 {offsets = [6, 0], sizes = [2, 128], strides = [1, 1]} : vector<16x128xf32> to vector<2x128xf32>
    %105 = vector.extract_strided_slice %104 {offsets = [0, 0], sizes = [2, 32], strides = [1, 1]} : vector<2x128xf32> to vector<2x32xf32>
    %106 = vector.extract_strided_slice %104 {offsets = [0, 32], sizes = [2, 32], strides = [1, 1]} : vector<2x128xf32> to vector<2x32xf32>
    %107 = vector.extract_strided_slice %104 {offsets = [0, 64], sizes = [2, 32], strides = [1, 1]} : vector<2x128xf32> to vector<2x32xf32>
    %cst_36 = arith.constant dense<0.000000e+00> : vector<2x128xf32>
    %108 = tpu.matmul %103, %4, %cst_36 {dimension_numbers = #tpu.dot_dimension_numbers<[1], [0], [0], [1], [0, 0, 1, 1], [], []>} : vector<2x32xf32>, vector<32x128xf32>, vector<2x128xf32> -> vector<2x128xf32>
    %109 = vector.extract_strided_slice %108 {offsets = [0, 0], sizes = [2, 32], strides = [1, 1]} : vector<2x128xf32> to vector<2x32xf32>
    %110 = arith.addf %105, %109 : vector<2x32xf32>
    %cst_37 = arith.constant 5.000000e-01 : f32
    %111 = vector.broadcast %cst_37 : f32 to vector<2x32xf32>
    %112 = arith.mulf %111, %110 : vector<2x32xf32>
    %113 = math.tanh %112 : vector<2x32xf32>
    %cst_38 = arith.constant 1.000000e+00 : f32
    %114 = vector.broadcast %cst_38 : f32 to vector<2x32xf32>
    %115 = arith.addf %113, %114 : vector<2x32xf32>
    %cst_39 = arith.constant 5.000000e-01 : f32
    %116 = vector.broadcast %cst_39 : f32 to vector<2x32xf32>
    %117 = arith.mulf %116, %115 : vector<2x32xf32>
    %118 = vector.extract_strided_slice %108 {offsets = [0, 32], sizes = [2, 32], strides = [1, 1]} : vector<2x128xf32> to vector<2x32xf32>
    %119 = arith.addf %106, %118 : vector<2x32xf32>
    %cst_40 = arith.constant 5.000000e-01 : f32
    %120 = vector.broadcast %cst_40 : f32 to vector<2x32xf32>
    %121 = arith.mulf %120, %119 : vector<2x32xf32>
    %122 = math.tanh %121 : vector<2x32xf32>
    %cst_41 = arith.constant 1.000000e+00 : f32
    %123 = vector.broadcast %cst_41 : f32 to vector<2x32xf32>
    %124 = arith.addf %122, %123 : vector<2x32xf32>
    %cst_42 = arith.constant 5.000000e-01 : f32
    %125 = vector.broadcast %cst_42 : f32 to vector<2x32xf32>
    %126 = arith.mulf %125, %124 : vector<2x32xf32>
    %127 = vector.extract_strided_slice %108 {offsets = [0, 64], sizes = [2, 32], strides = [1, 1]} : vector<2x128xf32> to vector<2x32xf32>
    %128 = arith.addf %127, %13 : vector<2x32xf32>
    %129 = arith.mulf %117, %128 : vector<2x32xf32>
    %130 = arith.addf %107, %129 : vector<2x32xf32>
    %131 = math.tanh %130 : vector<2x32xf32>
    %cst_43 = arith.constant 1.000000e+00 : f32
    %132 = vector.broadcast %cst_43 : f32 to vector<2x32xf32>
    %133 = arith.subf %132, %126 : vector<2x32xf32>
    %134 = arith.mulf %133, %131 : vector<2x32xf32>
    %135 = arith.mulf %126, %103 : vector<2x32xf32>
    %136 = arith.addf %134, %135 : vector<2x32xf32>
    %137 = vector.extract_strided_slice %9 {offsets = [8, 0], sizes = [2, 128], strides = [1, 1]} : vector<16x128xf32> to vector<2x128xf32>
    %138 = vector.extract_strided_slice %137 {offsets = [0, 0], sizes = [2, 32], strides = [1, 1]} : vector<2x128xf32> to vector<2x32xf32>
    %139 = vector.extract_strided_slice %137 {offsets = [0, 32], sizes = [2, 32], strides = [1, 1]} : vector<2x128xf32> to vector<2x32xf32>
    %140 = vector.extract_strided_slice %137 {offsets = [0, 64], sizes = [2, 32], strides = [1, 1]} : vector<2x128xf32> to vector<2x32xf32>
    %cst_44 = arith.constant dense<0.000000e+00> : vector<2x128xf32>
    %141 = tpu.matmul %136, %4, %cst_44 {dimension_numbers = #tpu.dot_dimension_numbers<[1], [0], [0], [1], [0, 0, 1, 1], [], []>} : vector<2x32xf32>, vector<32x128xf32>, vector<2x128xf32> -> vector<2x128xf32>
    %142 = vector.extract_strided_slice %141 {offsets = [0, 0], sizes = [2, 32], strides = [1, 1]} : vector<2x128xf32> to vector<2x32xf32>
    %143 = arith.addf %138, %142 : vector<2x32xf32>
    %cst_45 = arith.constant 5.000000e-01 : f32
    %144 = vector.broadcast %cst_45 : f32 to vector<2x32xf32>
    %145 = arith.mulf %144, %143 : vector<2x32xf32>
    %146 = math.tanh %145 : vector<2x32xf32>
    %cst_46 = arith.constant 1.000000e+00 : f32
    %147 = vector.broadcast %cst_46 : f32 to vector<2x32xf32>
    %148 = arith.addf %146, %147 : vector<2x32xf32>
    %cst_47 = arith.constant 5.000000e-01 : f32
    %149 = vector.broadcast %cst_47 : f32 to vector<2x32xf32>
    %150 = arith.mulf %149, %148 : vector<2x32xf32>
    %151 = vector.extract_strided_slice %141 {offsets = [0, 32], sizes = [2, 32], strides = [1, 1]} : vector<2x128xf32> to vector<2x32xf32>
    %152 = arith.addf %139, %151 : vector<2x32xf32>
    %cst_48 = arith.constant 5.000000e-01 : f32
    %153 = vector.broadcast %cst_48 : f32 to vector<2x32xf32>
    %154 = arith.mulf %153, %152 : vector<2x32xf32>
    %155 = math.tanh %154 : vector<2x32xf32>
    %cst_49 = arith.constant 1.000000e+00 : f32
    %156 = vector.broadcast %cst_49 : f32 to vector<2x32xf32>
    %157 = arith.addf %155, %156 : vector<2x32xf32>
    %cst_50 = arith.constant 5.000000e-01 : f32
    %158 = vector.broadcast %cst_50 : f32 to vector<2x32xf32>
    %159 = arith.mulf %158, %157 : vector<2x32xf32>
    %160 = vector.extract_strided_slice %141 {offsets = [0, 64], sizes = [2, 32], strides = [1, 1]} : vector<2x128xf32> to vector<2x32xf32>
    %161 = arith.addf %160, %13 : vector<2x32xf32>
    %162 = arith.mulf %150, %161 : vector<2x32xf32>
    %163 = arith.addf %140, %162 : vector<2x32xf32>
    %164 = math.tanh %163 : vector<2x32xf32>
    %cst_51 = arith.constant 1.000000e+00 : f32
    %165 = vector.broadcast %cst_51 : f32 to vector<2x32xf32>
    %166 = arith.subf %165, %159 : vector<2x32xf32>
    %167 = arith.mulf %166, %164 : vector<2x32xf32>
    %168 = arith.mulf %159, %136 : vector<2x32xf32>
    %169 = arith.addf %167, %168 : vector<2x32xf32>
    %170 = vector.extract_strided_slice %9 {offsets = [10, 0], sizes = [2, 128], strides = [1, 1]} : vector<16x128xf32> to vector<2x128xf32>
    %171 = vector.extract_strided_slice %170 {offsets = [0, 0], sizes = [2, 32], strides = [1, 1]} : vector<2x128xf32> to vector<2x32xf32>
    %172 = vector.extract_strided_slice %170 {offsets = [0, 32], sizes = [2, 32], strides = [1, 1]} : vector<2x128xf32> to vector<2x32xf32>
    %173 = vector.extract_strided_slice %170 {offsets = [0, 64], sizes = [2, 32], strides = [1, 1]} : vector<2x128xf32> to vector<2x32xf32>
    %cst_52 = arith.constant dense<0.000000e+00> : vector<2x128xf32>
    %174 = tpu.matmul %169, %4, %cst_52 {dimension_numbers = #tpu.dot_dimension_numbers<[1], [0], [0], [1], [0, 0, 1, 1], [], []>} : vector<2x32xf32>, vector<32x128xf32>, vector<2x128xf32> -> vector<2x128xf32>
    %175 = vector.extract_strided_slice %174 {offsets = [0, 0], sizes = [2, 32], strides = [1, 1]} : vector<2x128xf32> to vector<2x32xf32>
    %176 = arith.addf %171, %175 : vector<2x32xf32>
    %cst_53 = arith.constant 5.000000e-01 : f32
    %177 = vector.broadcast %cst_53 : f32 to vector<2x32xf32>
    %178 = arith.mulf %177, %176 : vector<2x32xf32>
    %179 = math.tanh %178 : vector<2x32xf32>
    %cst_54 = arith.constant 1.000000e+00 : f32
    %180 = vector.broadcast %cst_54 : f32 to vector<2x32xf32>
    %181 = arith.addf %179, %180 : vector<2x32xf32>
    %cst_55 = arith.constant 5.000000e-01 : f32
    %182 = vector.broadcast %cst_55 : f32 to vector<2x32xf32>
    %183 = arith.mulf %182, %181 : vector<2x32xf32>
    %184 = vector.extract_strided_slice %174 {offsets = [0, 32], sizes = [2, 32], strides = [1, 1]} : vector<2x128xf32> to vector<2x32xf32>
    %185 = arith.addf %172, %184 : vector<2x32xf32>
    %cst_56 = arith.constant 5.000000e-01 : f32
    %186 = vector.broadcast %cst_56 : f32 to vector<2x32xf32>
    %187 = arith.mulf %186, %185 : vector<2x32xf32>
    %188 = math.tanh %187 : vector<2x32xf32>
    %cst_57 = arith.constant 1.000000e+00 : f32
    %189 = vector.broadcast %cst_57 : f32 to vector<2x32xf32>
    %190 = arith.addf %188, %189 : vector<2x32xf32>
    %cst_58 = arith.constant 5.000000e-01 : f32
    %191 = vector.broadcast %cst_58 : f32 to vector<2x32xf32>
    %192 = arith.mulf %191, %190 : vector<2x32xf32>
    %193 = vector.extract_strided_slice %174 {offsets = [0, 64], sizes = [2, 32], strides = [1, 1]} : vector<2x128xf32> to vector<2x32xf32>
    %194 = arith.addf %193, %13 : vector<2x32xf32>
    %195 = arith.mulf %183, %194 : vector<2x32xf32>
    %196 = arith.addf %173, %195 : vector<2x32xf32>
    %197 = math.tanh %196 : vector<2x32xf32>
    %cst_59 = arith.constant 1.000000e+00 : f32
    %198 = vector.broadcast %cst_59 : f32 to vector<2x32xf32>
    %199 = arith.subf %198, %192 : vector<2x32xf32>
    %200 = arith.mulf %199, %197 : vector<2x32xf32>
    %201 = arith.mulf %192, %169 : vector<2x32xf32>
    %202 = arith.addf %200, %201 : vector<2x32xf32>
    %203 = vector.extract_strided_slice %9 {offsets = [12, 0], sizes = [2, 128], strides = [1, 1]} : vector<16x128xf32> to vector<2x128xf32>
    %204 = vector.extract_strided_slice %203 {offsets = [0, 0], sizes = [2, 32], strides = [1, 1]} : vector<2x128xf32> to vector<2x32xf32>
    %205 = vector.extract_strided_slice %203 {offsets = [0, 32], sizes = [2, 32], strides = [1, 1]} : vector<2x128xf32> to vector<2x32xf32>
    %206 = vector.extract_strided_slice %203 {offsets = [0, 64], sizes = [2, 32], strides = [1, 1]} : vector<2x128xf32> to vector<2x32xf32>
    %cst_60 = arith.constant dense<0.000000e+00> : vector<2x128xf32>
    %207 = tpu.matmul %202, %4, %cst_60 {dimension_numbers = #tpu.dot_dimension_numbers<[1], [0], [0], [1], [0, 0, 1, 1], [], []>} : vector<2x32xf32>, vector<32x128xf32>, vector<2x128xf32> -> vector<2x128xf32>
    %208 = vector.extract_strided_slice %207 {offsets = [0, 0], sizes = [2, 32], strides = [1, 1]} : vector<2x128xf32> to vector<2x32xf32>
    %209 = arith.addf %204, %208 : vector<2x32xf32>
    %cst_61 = arith.constant 5.000000e-01 : f32
    %210 = vector.broadcast %cst_61 : f32 to vector<2x32xf32>
    %211 = arith.mulf %210, %209 : vector<2x32xf32>
    %212 = math.tanh %211 : vector<2x32xf32>
    %cst_62 = arith.constant 1.000000e+00 : f32
    %213 = vector.broadcast %cst_62 : f32 to vector<2x32xf32>
    %214 = arith.addf %212, %213 : vector<2x32xf32>
    %cst_63 = arith.constant 5.000000e-01 : f32
    %215 = vector.broadcast %cst_63 : f32 to vector<2x32xf32>
    %216 = arith.mulf %215, %214 : vector<2x32xf32>
    %217 = vector.extract_strided_slice %207 {offsets = [0, 32], sizes = [2, 32], strides = [1, 1]} : vector<2x128xf32> to vector<2x32xf32>
    %218 = arith.addf %205, %217 : vector<2x32xf32>
    %cst_64 = arith.constant 5.000000e-01 : f32
    %219 = vector.broadcast %cst_64 : f32 to vector<2x32xf32>
    %220 = arith.mulf %219, %218 : vector<2x32xf32>
    %221 = math.tanh %220 : vector<2x32xf32>
    %cst_65 = arith.constant 1.000000e+00 : f32
    %222 = vector.broadcast %cst_65 : f32 to vector<2x32xf32>
    %223 = arith.addf %221, %222 : vector<2x32xf32>
    %cst_66 = arith.constant 5.000000e-01 : f32
    %224 = vector.broadcast %cst_66 : f32 to vector<2x32xf32>
    %225 = arith.mulf %224, %223 : vector<2x32xf32>
    %226 = vector.extract_strided_slice %207 {offsets = [0, 64], sizes = [2, 32], strides = [1, 1]} : vector<2x128xf32> to vector<2x32xf32>
    %227 = arith.addf %226, %13 : vector<2x32xf32>
    %228 = arith.mulf %216, %227 : vector<2x32xf32>
    %229 = arith.addf %206, %228 : vector<2x32xf32>
    %230 = math.tanh %229 : vector<2x32xf32>
    %cst_67 = arith.constant 1.000000e+00 : f32
    %231 = vector.broadcast %cst_67 : f32 to vector<2x32xf32>
    %232 = arith.subf %231, %225 : vector<2x32xf32>
    %233 = arith.mulf %232, %230 : vector<2x32xf32>
    %234 = arith.mulf %225, %202 : vector<2x32xf32>
    %235 = arith.addf %233, %234 : vector<2x32xf32>
    %236 = vector.extract_strided_slice %9 {offsets = [14, 0], sizes = [2, 128], strides = [1, 1]} : vector<16x128xf32> to vector<2x128xf32>
    %237 = vector.extract_strided_slice %236 {offsets = [0, 0], sizes = [2, 32], strides = [1, 1]} : vector<2x128xf32> to vector<2x32xf32>
    %238 = vector.extract_strided_slice %236 {offsets = [0, 32], sizes = [2, 32], strides = [1, 1]} : vector<2x128xf32> to vector<2x32xf32>
    %239 = vector.extract_strided_slice %236 {offsets = [0, 64], sizes = [2, 32], strides = [1, 1]} : vector<2x128xf32> to vector<2x32xf32>
    %cst_68 = arith.constant dense<0.000000e+00> : vector<2x128xf32>
    %240 = tpu.matmul %235, %4, %cst_68 {dimension_numbers = #tpu.dot_dimension_numbers<[1], [0], [0], [1], [0, 0, 1, 1], [], []>} : vector<2x32xf32>, vector<32x128xf32>, vector<2x128xf32> -> vector<2x128xf32>
    %241 = vector.extract_strided_slice %240 {offsets = [0, 0], sizes = [2, 32], strides = [1, 1]} : vector<2x128xf32> to vector<2x32xf32>
    %242 = arith.addf %237, %241 : vector<2x32xf32>
    %cst_69 = arith.constant 5.000000e-01 : f32
    %243 = vector.broadcast %cst_69 : f32 to vector<2x32xf32>
    %244 = arith.mulf %243, %242 : vector<2x32xf32>
    %245 = math.tanh %244 : vector<2x32xf32>
    %cst_70 = arith.constant 1.000000e+00 : f32
    %246 = vector.broadcast %cst_70 : f32 to vector<2x32xf32>
    %247 = arith.addf %245, %246 : vector<2x32xf32>
    %cst_71 = arith.constant 5.000000e-01 : f32
    %248 = vector.broadcast %cst_71 : f32 to vector<2x32xf32>
    %249 = arith.mulf %248, %247 : vector<2x32xf32>
    %250 = vector.extract_strided_slice %240 {offsets = [0, 32], sizes = [2, 32], strides = [1, 1]} : vector<2x128xf32> to vector<2x32xf32>
    %251 = arith.addf %238, %250 : vector<2x32xf32>
    %cst_72 = arith.constant 5.000000e-01 : f32
    %252 = vector.broadcast %cst_72 : f32 to vector<2x32xf32>
    %253 = arith.mulf %252, %251 : vector<2x32xf32>
    %254 = math.tanh %253 : vector<2x32xf32>
    %cst_73 = arith.constant 1.000000e+00 : f32
    %255 = vector.broadcast %cst_73 : f32 to vector<2x32xf32>
    %256 = arith.addf %254, %255 : vector<2x32xf32>
    %cst_74 = arith.constant 5.000000e-01 : f32
    %257 = vector.broadcast %cst_74 : f32 to vector<2x32xf32>
    %258 = arith.mulf %257, %256 : vector<2x32xf32>
    %259 = vector.extract_strided_slice %240 {offsets = [0, 64], sizes = [2, 32], strides = [1, 1]} : vector<2x128xf32> to vector<2x32xf32>
    %260 = arith.addf %259, %13 : vector<2x32xf32>
    %261 = arith.mulf %249, %260 : vector<2x32xf32>
    %262 = arith.addf %239, %261 : vector<2x32xf32>
    %263 = math.tanh %262 : vector<2x32xf32>
    %cst_75 = arith.constant 1.000000e+00 : f32
    %264 = vector.broadcast %cst_75 : f32 to vector<2x32xf32>
    %265 = arith.subf %264, %258 : vector<2x32xf32>
    %266 = arith.mulf %265, %263 : vector<2x32xf32>
    %267 = arith.mulf %258, %235 : vector<2x32xf32>
    %268 = arith.addf %266, %267 : vector<2x32xf32>
    %269 = tpu.concatenate %37, %70, %103, %136, %169, %202, %235, %268 in 0 : vector<2x32xf32>, vector<2x32xf32>, vector<2x32xf32>, vector<2x32xf32>, vector<2x32xf32>, vector<2x32xf32>, vector<2x32xf32>, vector<2x32xf32> -> vector<16x32xf32>
    %c0_76 = arith.constant 0 : index
    %c0_77 = arith.constant 0 : index
    %270 = vector.load %arg3[%c0_76, %c0_77] : memref<32x128xf32, #tpu.memory_space<vmem>>, vector<32x128xf32>
    %c1 = arith.constant 1 : index
    %c0_78 = arith.constant 0 : index
    %c0_79 = arith.constant 0 : index
    %271 = vector.load %arg4[%c1, %c0_78, %c0_79] : memref<2x32x128xf32, #tpu.memory_space<vmem>>, vector<1x32x128xf32>
    %272 = vector.shape_cast %271 : vector<1x32x128xf32> to vector<32x128xf32>
    %cst_80 = arith.constant dense<0.000000e+00> : vector<16x128xf32>
    %273 = tpu.matmul %269, %270, %cst_80 {dimension_numbers = #tpu.dot_dimension_numbers<[1], [0], [0], [1], [0, 0, 1, 1], [], []>} : vector<16x32xf32>, vector<32x128xf32>, vector<16x128xf32> -> vector<16x128xf32>
    %c1_81 = arith.constant 1 : index
    %c0_82 = arith.constant 0 : index
    %c0_83 = arith.constant 0 : index
    %274 = vector.load %arg5[%c1_81, %c0_82, %c0_83] : memref<2x1x128xf32, #tpu.memory_space<vmem>>, vector<1x1x128xf32>
    %275 = vector.shape_cast %274 : vector<1x1x128xf32> to vector<1x128xf32>
    %276 = vector.broadcast %275 : vector<1x128xf32> to vector<16x128xf32>
    %277 = arith.addf %273, %276 : vector<16x128xf32>
    %c1_84 = arith.constant 1 : index
    %c0_85 = arith.constant 0 : index
    %c0_86 = arith.constant 0 : index
    %278 = vector.load %arg6[%c1_84, %c0_85, %c0_86] : memref<2x1x32xf32, #tpu.memory_space<vmem>>, vector<1x1x32xf32>
    %279 = vector.shape_cast %278 : vector<1x1x32xf32> to vector<1x32xf32>
    %280 = vector.shape_cast %279 : vector<1x32xf32> to vector<1x32xf32>
    %281 = vector.broadcast %280 : vector<1x32xf32> to vector<2x32xf32>
    %282 = vector.extract_strided_slice %277 {offsets = [0, 0], sizes = [2, 128], strides = [1, 1]} : vector<16x128xf32> to vector<2x128xf32>
    %283 = vector.extract_strided_slice %282 {offsets = [0, 0], sizes = [2, 32], strides = [1, 1]} : vector<2x128xf32> to vector<2x32xf32>
    %284 = vector.extract_strided_slice %282 {offsets = [0, 32], sizes = [2, 32], strides = [1, 1]} : vector<2x128xf32> to vector<2x32xf32>
    %285 = vector.extract_strided_slice %282 {offsets = [0, 64], sizes = [2, 32], strides = [1, 1]} : vector<2x128xf32> to vector<2x32xf32>
    %cst_87 = arith.constant 5.000000e-01 : f32
    %286 = vector.broadcast %cst_87 : f32 to vector<2x32xf32>
    %287 = arith.mulf %286, %283 : vector<2x32xf32>
    %288 = math.tanh %287 : vector<2x32xf32>
    %cst_88 = arith.constant 1.000000e+00 : f32
    %289 = vector.broadcast %cst_88 : f32 to vector<2x32xf32>
    %290 = arith.addf %288, %289 : vector<2x32xf32>
    %cst_89 = arith.constant 5.000000e-01 : f32
    %291 = vector.broadcast %cst_89 : f32 to vector<2x32xf32>
    %292 = arith.mulf %291, %290 : vector<2x32xf32>
    %cst_90 = arith.constant 5.000000e-01 : f32
    %293 = vector.broadcast %cst_90 : f32 to vector<2x32xf32>
    %294 = arith.mulf %293, %284 : vector<2x32xf32>
    %295 = math.tanh %294 : vector<2x32xf32>
    %cst_91 = arith.constant 1.000000e+00 : f32
    %296 = vector.broadcast %cst_91 : f32 to vector<2x32xf32>
    %297 = arith.addf %295, %296 : vector<2x32xf32>
    %cst_92 = arith.constant 5.000000e-01 : f32
    %298 = vector.broadcast %cst_92 : f32 to vector<2x32xf32>
    %299 = arith.mulf %298, %297 : vector<2x32xf32>
    %300 = arith.mulf %292, %281 : vector<2x32xf32>
    %301 = arith.addf %285, %300 : vector<2x32xf32>
    %302 = math.tanh %301 : vector<2x32xf32>
    %cst_93 = arith.constant 1.000000e+00 : f32
    %303 = vector.broadcast %cst_93 : f32 to vector<2x32xf32>
    %304 = arith.subf %303, %299 : vector<2x32xf32>
    %305 = arith.mulf %304, %302 : vector<2x32xf32>
    %306 = vector.extract_strided_slice %277 {offsets = [2, 0], sizes = [2, 128], strides = [1, 1]} : vector<16x128xf32> to vector<2x128xf32>
    %307 = vector.extract_strided_slice %306 {offsets = [0, 0], sizes = [2, 32], strides = [1, 1]} : vector<2x128xf32> to vector<2x32xf32>
    %308 = vector.extract_strided_slice %306 {offsets = [0, 32], sizes = [2, 32], strides = [1, 1]} : vector<2x128xf32> to vector<2x32xf32>
    %309 = vector.extract_strided_slice %306 {offsets = [0, 64], sizes = [2, 32], strides = [1, 1]} : vector<2x128xf32> to vector<2x32xf32>
    %cst_94 = arith.constant dense<0.000000e+00> : vector<2x128xf32>
    %310 = tpu.matmul %305, %272, %cst_94 {dimension_numbers = #tpu.dot_dimension_numbers<[1], [0], [0], [1], [0, 0, 1, 1], [], []>} : vector<2x32xf32>, vector<32x128xf32>, vector<2x128xf32> -> vector<2x128xf32>
    %311 = vector.extract_strided_slice %310 {offsets = [0, 0], sizes = [2, 32], strides = [1, 1]} : vector<2x128xf32> to vector<2x32xf32>
    %312 = arith.addf %307, %311 : vector<2x32xf32>
    %cst_95 = arith.constant 5.000000e-01 : f32
    %313 = vector.broadcast %cst_95 : f32 to vector<2x32xf32>
    %314 = arith.mulf %313, %312 : vector<2x32xf32>
    %315 = math.tanh %314 : vector<2x32xf32>
    %cst_96 = arith.constant 1.000000e+00 : f32
    %316 = vector.broadcast %cst_96 : f32 to vector<2x32xf32>
    %317 = arith.addf %315, %316 : vector<2x32xf32>
    %cst_97 = arith.constant 5.000000e-01 : f32
    %318 = vector.broadcast %cst_97 : f32 to vector<2x32xf32>
    %319 = arith.mulf %318, %317 : vector<2x32xf32>
    %320 = vector.extract_strided_slice %310 {offsets = [0, 32], sizes = [2, 32], strides = [1, 1]} : vector<2x128xf32> to vector<2x32xf32>
    %321 = arith.addf %308, %320 : vector<2x32xf32>
    %cst_98 = arith.constant 5.000000e-01 : f32
    %322 = vector.broadcast %cst_98 : f32 to vector<2x32xf32>
    %323 = arith.mulf %322, %321 : vector<2x32xf32>
    %324 = math.tanh %323 : vector<2x32xf32>
    %cst_99 = arith.constant 1.000000e+00 : f32
    %325 = vector.broadcast %cst_99 : f32 to vector<2x32xf32>
    %326 = arith.addf %324, %325 : vector<2x32xf32>
    %cst_100 = arith.constant 5.000000e-01 : f32
    %327 = vector.broadcast %cst_100 : f32 to vector<2x32xf32>
    %328 = arith.mulf %327, %326 : vector<2x32xf32>
    %329 = vector.extract_strided_slice %310 {offsets = [0, 64], sizes = [2, 32], strides = [1, 1]} : vector<2x128xf32> to vector<2x32xf32>
    %330 = arith.addf %329, %281 : vector<2x32xf32>
    %331 = arith.mulf %319, %330 : vector<2x32xf32>
    %332 = arith.addf %309, %331 : vector<2x32xf32>
    %333 = math.tanh %332 : vector<2x32xf32>
    %cst_101 = arith.constant 1.000000e+00 : f32
    %334 = vector.broadcast %cst_101 : f32 to vector<2x32xf32>
    %335 = arith.subf %334, %328 : vector<2x32xf32>
    %336 = arith.mulf %335, %333 : vector<2x32xf32>
    %337 = arith.mulf %328, %305 : vector<2x32xf32>
    %338 = arith.addf %336, %337 : vector<2x32xf32>
    %339 = vector.extract_strided_slice %277 {offsets = [4, 0], sizes = [2, 128], strides = [1, 1]} : vector<16x128xf32> to vector<2x128xf32>
    %340 = vector.extract_strided_slice %339 {offsets = [0, 0], sizes = [2, 32], strides = [1, 1]} : vector<2x128xf32> to vector<2x32xf32>
    %341 = vector.extract_strided_slice %339 {offsets = [0, 32], sizes = [2, 32], strides = [1, 1]} : vector<2x128xf32> to vector<2x32xf32>
    %342 = vector.extract_strided_slice %339 {offsets = [0, 64], sizes = [2, 32], strides = [1, 1]} : vector<2x128xf32> to vector<2x32xf32>
    %cst_102 = arith.constant dense<0.000000e+00> : vector<2x128xf32>
    %343 = tpu.matmul %338, %272, %cst_102 {dimension_numbers = #tpu.dot_dimension_numbers<[1], [0], [0], [1], [0, 0, 1, 1], [], []>} : vector<2x32xf32>, vector<32x128xf32>, vector<2x128xf32> -> vector<2x128xf32>
    %344 = vector.extract_strided_slice %343 {offsets = [0, 0], sizes = [2, 32], strides = [1, 1]} : vector<2x128xf32> to vector<2x32xf32>
    %345 = arith.addf %340, %344 : vector<2x32xf32>
    %cst_103 = arith.constant 5.000000e-01 : f32
    %346 = vector.broadcast %cst_103 : f32 to vector<2x32xf32>
    %347 = arith.mulf %346, %345 : vector<2x32xf32>
    %348 = math.tanh %347 : vector<2x32xf32>
    %cst_104 = arith.constant 1.000000e+00 : f32
    %349 = vector.broadcast %cst_104 : f32 to vector<2x32xf32>
    %350 = arith.addf %348, %349 : vector<2x32xf32>
    %cst_105 = arith.constant 5.000000e-01 : f32
    %351 = vector.broadcast %cst_105 : f32 to vector<2x32xf32>
    %352 = arith.mulf %351, %350 : vector<2x32xf32>
    %353 = vector.extract_strided_slice %343 {offsets = [0, 32], sizes = [2, 32], strides = [1, 1]} : vector<2x128xf32> to vector<2x32xf32>
    %354 = arith.addf %341, %353 : vector<2x32xf32>
    %cst_106 = arith.constant 5.000000e-01 : f32
    %355 = vector.broadcast %cst_106 : f32 to vector<2x32xf32>
    %356 = arith.mulf %355, %354 : vector<2x32xf32>
    %357 = math.tanh %356 : vector<2x32xf32>
    %cst_107 = arith.constant 1.000000e+00 : f32
    %358 = vector.broadcast %cst_107 : f32 to vector<2x32xf32>
    %359 = arith.addf %357, %358 : vector<2x32xf32>
    %cst_108 = arith.constant 5.000000e-01 : f32
    %360 = vector.broadcast %cst_108 : f32 to vector<2x32xf32>
    %361 = arith.mulf %360, %359 : vector<2x32xf32>
    %362 = vector.extract_strided_slice %343 {offsets = [0, 64], sizes = [2, 32], strides = [1, 1]} : vector<2x128xf32> to vector<2x32xf32>
    %363 = arith.addf %362, %281 : vector<2x32xf32>
    %364 = arith.mulf %352, %363 : vector<2x32xf32>
    %365 = arith.addf %342, %364 : vector<2x32xf32>
    %366 = math.tanh %365 : vector<2x32xf32>
    %cst_109 = arith.constant 1.000000e+00 : f32
    %367 = vector.broadcast %cst_109 : f32 to vector<2x32xf32>
    %368 = arith.subf %367, %361 : vector<2x32xf32>
    %369 = arith.mulf %368, %366 : vector<2x32xf32>
    %370 = arith.mulf %361, %338 : vector<2x32xf32>
    %371 = arith.addf %369, %370 : vector<2x32xf32>
    %372 = vector.extract_strided_slice %277 {offsets = [6, 0], sizes = [2, 128], strides = [1, 1]} : vector<16x128xf32> to vector<2x128xf32>
    %373 = vector.extract_strided_slice %372 {offsets = [0, 0], sizes = [2, 32], strides = [1, 1]} : vector<2x128xf32> to vector<2x32xf32>
    %374 = vector.extract_strided_slice %372 {offsets = [0, 32], sizes = [2, 32], strides = [1, 1]} : vector<2x128xf32> to vector<2x32xf32>
    %375 = vector.extract_strided_slice %372 {offsets = [0, 64], sizes = [2, 32], strides = [1, 1]} : vector<2x128xf32> to vector<2x32xf32>
    %cst_110 = arith.constant dense<0.000000e+00> : vector<2x128xf32>
    %376 = tpu.matmul %371, %272, %cst_110 {dimension_numbers = #tpu.dot_dimension_numbers<[1], [0], [0], [1], [0, 0, 1, 1], [], []>} : vector<2x32xf32>, vector<32x128xf32>, vector<2x128xf32> -> vector<2x128xf32>
    %377 = vector.extract_strided_slice %376 {offsets = [0, 0], sizes = [2, 32], strides = [1, 1]} : vector<2x128xf32> to vector<2x32xf32>
    %378 = arith.addf %373, %377 : vector<2x32xf32>
    %cst_111 = arith.constant 5.000000e-01 : f32
    %379 = vector.broadcast %cst_111 : f32 to vector<2x32xf32>
    %380 = arith.mulf %379, %378 : vector<2x32xf32>
    %381 = math.tanh %380 : vector<2x32xf32>
    %cst_112 = arith.constant 1.000000e+00 : f32
    %382 = vector.broadcast %cst_112 : f32 to vector<2x32xf32>
    %383 = arith.addf %381, %382 : vector<2x32xf32>
    %cst_113 = arith.constant 5.000000e-01 : f32
    %384 = vector.broadcast %cst_113 : f32 to vector<2x32xf32>
    %385 = arith.mulf %384, %383 : vector<2x32xf32>
    %386 = vector.extract_strided_slice %376 {offsets = [0, 32], sizes = [2, 32], strides = [1, 1]} : vector<2x128xf32> to vector<2x32xf32>
    %387 = arith.addf %374, %386 : vector<2x32xf32>
    %cst_114 = arith.constant 5.000000e-01 : f32
    %388 = vector.broadcast %cst_114 : f32 to vector<2x32xf32>
    %389 = arith.mulf %388, %387 : vector<2x32xf32>
    %390 = math.tanh %389 : vector<2x32xf32>
    %cst_115 = arith.constant 1.000000e+00 : f32
    %391 = vector.broadcast %cst_115 : f32 to vector<2x32xf32>
    %392 = arith.addf %390, %391 : vector<2x32xf32>
    %cst_116 = arith.constant 5.000000e-01 : f32
    %393 = vector.broadcast %cst_116 : f32 to vector<2x32xf32>
    %394 = arith.mulf %393, %392 : vector<2x32xf32>
    %395 = vector.extract_strided_slice %376 {offsets = [0, 64], sizes = [2, 32], strides = [1, 1]} : vector<2x128xf32> to vector<2x32xf32>
    %396 = arith.addf %395, %281 : vector<2x32xf32>
    %397 = arith.mulf %385, %396 : vector<2x32xf32>
    %398 = arith.addf %375, %397 : vector<2x32xf32>
    %399 = math.tanh %398 : vector<2x32xf32>
    %cst_117 = arith.constant 1.000000e+00 : f32
    %400 = vector.broadcast %cst_117 : f32 to vector<2x32xf32>
    %401 = arith.subf %400, %394 : vector<2x32xf32>
    %402 = arith.mulf %401, %399 : vector<2x32xf32>
    %403 = arith.mulf %394, %371 : vector<2x32xf32>
    %404 = arith.addf %402, %403 : vector<2x32xf32>
    %405 = vector.extract_strided_slice %277 {offsets = [8, 0], sizes = [2, 128], strides = [1, 1]} : vector<16x128xf32> to vector<2x128xf32>
    %406 = vector.extract_strided_slice %405 {offsets = [0, 0], sizes = [2, 32], strides = [1, 1]} : vector<2x128xf32> to vector<2x32xf32>
    %407 = vector.extract_strided_slice %405 {offsets = [0, 32], sizes = [2, 32], strides = [1, 1]} : vector<2x128xf32> to vector<2x32xf32>
    %408 = vector.extract_strided_slice %405 {offsets = [0, 64], sizes = [2, 32], strides = [1, 1]} : vector<2x128xf32> to vector<2x32xf32>
    %cst_118 = arith.constant dense<0.000000e+00> : vector<2x128xf32>
    %409 = tpu.matmul %404, %272, %cst_118 {dimension_numbers = #tpu.dot_dimension_numbers<[1], [0], [0], [1], [0, 0, 1, 1], [], []>} : vector<2x32xf32>, vector<32x128xf32>, vector<2x128xf32> -> vector<2x128xf32>
    %410 = vector.extract_strided_slice %409 {offsets = [0, 0], sizes = [2, 32], strides = [1, 1]} : vector<2x128xf32> to vector<2x32xf32>
    %411 = arith.addf %406, %410 : vector<2x32xf32>
    %cst_119 = arith.constant 5.000000e-01 : f32
    %412 = vector.broadcast %cst_119 : f32 to vector<2x32xf32>
    %413 = arith.mulf %412, %411 : vector<2x32xf32>
    %414 = math.tanh %413 : vector<2x32xf32>
    %cst_120 = arith.constant 1.000000e+00 : f32
    %415 = vector.broadcast %cst_120 : f32 to vector<2x32xf32>
    %416 = arith.addf %414, %415 : vector<2x32xf32>
    %cst_121 = arith.constant 5.000000e-01 : f32
    %417 = vector.broadcast %cst_121 : f32 to vector<2x32xf32>
    %418 = arith.mulf %417, %416 : vector<2x32xf32>
    %419 = vector.extract_strided_slice %409 {offsets = [0, 32], sizes = [2, 32], strides = [1, 1]} : vector<2x128xf32> to vector<2x32xf32>
    %420 = arith.addf %407, %419 : vector<2x32xf32>
    %cst_122 = arith.constant 5.000000e-01 : f32
    %421 = vector.broadcast %cst_122 : f32 to vector<2x32xf32>
    %422 = arith.mulf %421, %420 : vector<2x32xf32>
    %423 = math.tanh %422 : vector<2x32xf32>
    %cst_123 = arith.constant 1.000000e+00 : f32
    %424 = vector.broadcast %cst_123 : f32 to vector<2x32xf32>
    %425 = arith.addf %423, %424 : vector<2x32xf32>
    %cst_124 = arith.constant 5.000000e-01 : f32
    %426 = vector.broadcast %cst_124 : f32 to vector<2x32xf32>
    %427 = arith.mulf %426, %425 : vector<2x32xf32>
    %428 = vector.extract_strided_slice %409 {offsets = [0, 64], sizes = [2, 32], strides = [1, 1]} : vector<2x128xf32> to vector<2x32xf32>
    %429 = arith.addf %428, %281 : vector<2x32xf32>
    %430 = arith.mulf %418, %429 : vector<2x32xf32>
    %431 = arith.addf %408, %430 : vector<2x32xf32>
    %432 = math.tanh %431 : vector<2x32xf32>
    %cst_125 = arith.constant 1.000000e+00 : f32
    %433 = vector.broadcast %cst_125 : f32 to vector<2x32xf32>
    %434 = arith.subf %433, %427 : vector<2x32xf32>
    %435 = arith.mulf %434, %432 : vector<2x32xf32>
    %436 = arith.mulf %427, %404 : vector<2x32xf32>
    %437 = arith.addf %435, %436 : vector<2x32xf32>
    %438 = vector.extract_strided_slice %277 {offsets = [10, 0], sizes = [2, 128], strides = [1, 1]} : vector<16x128xf32> to vector<2x128xf32>
    %439 = vector.extract_strided_slice %438 {offsets = [0, 0], sizes = [2, 32], strides = [1, 1]} : vector<2x128xf32> to vector<2x32xf32>
    %440 = vector.extract_strided_slice %438 {offsets = [0, 32], sizes = [2, 32], strides = [1, 1]} : vector<2x128xf32> to vector<2x32xf32>
    %441 = vector.extract_strided_slice %438 {offsets = [0, 64], sizes = [2, 32], strides = [1, 1]} : vector<2x128xf32> to vector<2x32xf32>
    %cst_126 = arith.constant dense<0.000000e+00> : vector<2x128xf32>
    %442 = tpu.matmul %437, %272, %cst_126 {dimension_numbers = #tpu.dot_dimension_numbers<[1], [0], [0], [1], [0, 0, 1, 1], [], []>} : vector<2x32xf32>, vector<32x128xf32>, vector<2x128xf32> -> vector<2x128xf32>
    %443 = vector.extract_strided_slice %442 {offsets = [0, 0], sizes = [2, 32], strides = [1, 1]} : vector<2x128xf32> to vector<2x32xf32>
    %444 = arith.addf %439, %443 : vector<2x32xf32>
    %cst_127 = arith.constant 5.000000e-01 : f32
    %445 = vector.broadcast %cst_127 : f32 to vector<2x32xf32>
    %446 = arith.mulf %445, %444 : vector<2x32xf32>
    %447 = math.tanh %446 : vector<2x32xf32>
    %cst_128 = arith.constant 1.000000e+00 : f32
    %448 = vector.broadcast %cst_128 : f32 to vector<2x32xf32>
    %449 = arith.addf %447, %448 : vector<2x32xf32>
    %cst_129 = arith.constant 5.000000e-01 : f32
    %450 = vector.broadcast %cst_129 : f32 to vector<2x32xf32>
    %451 = arith.mulf %450, %449 : vector<2x32xf32>
    %452 = vector.extract_strided_slice %442 {offsets = [0, 32], sizes = [2, 32], strides = [1, 1]} : vector<2x128xf32> to vector<2x32xf32>
    %453 = arith.addf %440, %452 : vector<2x32xf32>
    %cst_130 = arith.constant 5.000000e-01 : f32
    %454 = vector.broadcast %cst_130 : f32 to vector<2x32xf32>
    %455 = arith.mulf %454, %453 : vector<2x32xf32>
    %456 = math.tanh %455 : vector<2x32xf32>
    %cst_131 = arith.constant 1.000000e+00 : f32
    %457 = vector.broadcast %cst_131 : f32 to vector<2x32xf32>
    %458 = arith.addf %456, %457 : vector<2x32xf32>
    %cst_132 = arith.constant 5.000000e-01 : f32
    %459 = vector.broadcast %cst_132 : f32 to vector<2x32xf32>
    %460 = arith.mulf %459, %458 : vector<2x32xf32>
    %461 = vector.extract_strided_slice %442 {offsets = [0, 64], sizes = [2, 32], strides = [1, 1]} : vector<2x128xf32> to vector<2x32xf32>
    %462 = arith.addf %461, %281 : vector<2x32xf32>
    %463 = arith.mulf %451, %462 : vector<2x32xf32>
    %464 = arith.addf %441, %463 : vector<2x32xf32>
    %465 = math.tanh %464 : vector<2x32xf32>
    %cst_133 = arith.constant 1.000000e+00 : f32
    %466 = vector.broadcast %cst_133 : f32 to vector<2x32xf32>
    %467 = arith.subf %466, %460 : vector<2x32xf32>
    %468 = arith.mulf %467, %465 : vector<2x32xf32>
    %469 = arith.mulf %460, %437 : vector<2x32xf32>
    %470 = arith.addf %468, %469 : vector<2x32xf32>
    %471 = vector.extract_strided_slice %277 {offsets = [12, 0], sizes = [2, 128], strides = [1, 1]} : vector<16x128xf32> to vector<2x128xf32>
    %472 = vector.extract_strided_slice %471 {offsets = [0, 0], sizes = [2, 32], strides = [1, 1]} : vector<2x128xf32> to vector<2x32xf32>
    %473 = vector.extract_strided_slice %471 {offsets = [0, 32], sizes = [2, 32], strides = [1, 1]} : vector<2x128xf32> to vector<2x32xf32>
    %474 = vector.extract_strided_slice %471 {offsets = [0, 64], sizes = [2, 32], strides = [1, 1]} : vector<2x128xf32> to vector<2x32xf32>
    %cst_134 = arith.constant dense<0.000000e+00> : vector<2x128xf32>
    %475 = tpu.matmul %470, %272, %cst_134 {dimension_numbers = #tpu.dot_dimension_numbers<[1], [0], [0], [1], [0, 0, 1, 1], [], []>} : vector<2x32xf32>, vector<32x128xf32>, vector<2x128xf32> -> vector<2x128xf32>
    %476 = vector.extract_strided_slice %475 {offsets = [0, 0], sizes = [2, 32], strides = [1, 1]} : vector<2x128xf32> to vector<2x32xf32>
    %477 = arith.addf %472, %476 : vector<2x32xf32>
    %cst_135 = arith.constant 5.000000e-01 : f32
    %478 = vector.broadcast %cst_135 : f32 to vector<2x32xf32>
    %479 = arith.mulf %478, %477 : vector<2x32xf32>
    %480 = math.tanh %479 : vector<2x32xf32>
    %cst_136 = arith.constant 1.000000e+00 : f32
    %481 = vector.broadcast %cst_136 : f32 to vector<2x32xf32>
    %482 = arith.addf %480, %481 : vector<2x32xf32>
    %cst_137 = arith.constant 5.000000e-01 : f32
    %483 = vector.broadcast %cst_137 : f32 to vector<2x32xf32>
    %484 = arith.mulf %483, %482 : vector<2x32xf32>
    %485 = vector.extract_strided_slice %475 {offsets = [0, 32], sizes = [2, 32], strides = [1, 1]} : vector<2x128xf32> to vector<2x32xf32>
    %486 = arith.addf %473, %485 : vector<2x32xf32>
    %cst_138 = arith.constant 5.000000e-01 : f32
    %487 = vector.broadcast %cst_138 : f32 to vector<2x32xf32>
    %488 = arith.mulf %487, %486 : vector<2x32xf32>
    %489 = math.tanh %488 : vector<2x32xf32>
    %cst_139 = arith.constant 1.000000e+00 : f32
    %490 = vector.broadcast %cst_139 : f32 to vector<2x32xf32>
    %491 = arith.addf %489, %490 : vector<2x32xf32>
    %cst_140 = arith.constant 5.000000e-01 : f32
    %492 = vector.broadcast %cst_140 : f32 to vector<2x32xf32>
    %493 = arith.mulf %492, %491 : vector<2x32xf32>
    %494 = vector.extract_strided_slice %475 {offsets = [0, 64], sizes = [2, 32], strides = [1, 1]} : vector<2x128xf32> to vector<2x32xf32>
    %495 = arith.addf %494, %281 : vector<2x32xf32>
    %496 = arith.mulf %484, %495 : vector<2x32xf32>
    %497 = arith.addf %474, %496 : vector<2x32xf32>
    %498 = math.tanh %497 : vector<2x32xf32>
    %cst_141 = arith.constant 1.000000e+00 : f32
    %499 = vector.broadcast %cst_141 : f32 to vector<2x32xf32>
    %500 = arith.subf %499, %493 : vector<2x32xf32>
    %501 = arith.mulf %500, %498 : vector<2x32xf32>
    %502 = arith.mulf %493, %470 : vector<2x32xf32>
    %503 = arith.addf %501, %502 : vector<2x32xf32>
    %504 = vector.extract_strided_slice %277 {offsets = [14, 0], sizes = [2, 128], strides = [1, 1]} : vector<16x128xf32> to vector<2x128xf32>
    %505 = vector.extract_strided_slice %504 {offsets = [0, 0], sizes = [2, 32], strides = [1, 1]} : vector<2x128xf32> to vector<2x32xf32>
    %506 = vector.extract_strided_slice %504 {offsets = [0, 32], sizes = [2, 32], strides = [1, 1]} : vector<2x128xf32> to vector<2x32xf32>
    %507 = vector.extract_strided_slice %504 {offsets = [0, 64], sizes = [2, 32], strides = [1, 1]} : vector<2x128xf32> to vector<2x32xf32>
    %cst_142 = arith.constant dense<0.000000e+00> : vector<2x128xf32>
    %508 = tpu.matmul %503, %272, %cst_142 {dimension_numbers = #tpu.dot_dimension_numbers<[1], [0], [0], [1], [0, 0, 1, 1], [], []>} : vector<2x32xf32>, vector<32x128xf32>, vector<2x128xf32> -> vector<2x128xf32>
    %509 = vector.extract_strided_slice %508 {offsets = [0, 0], sizes = [2, 32], strides = [1, 1]} : vector<2x128xf32> to vector<2x32xf32>
    %510 = arith.addf %505, %509 : vector<2x32xf32>
    %cst_143 = arith.constant 5.000000e-01 : f32
    %511 = vector.broadcast %cst_143 : f32 to vector<2x32xf32>
    %512 = arith.mulf %511, %510 : vector<2x32xf32>
    %513 = math.tanh %512 : vector<2x32xf32>
    %cst_144 = arith.constant 1.000000e+00 : f32
    %514 = vector.broadcast %cst_144 : f32 to vector<2x32xf32>
    %515 = arith.addf %513, %514 : vector<2x32xf32>
    %cst_145 = arith.constant 5.000000e-01 : f32
    %516 = vector.broadcast %cst_145 : f32 to vector<2x32xf32>
    %517 = arith.mulf %516, %515 : vector<2x32xf32>
    %518 = vector.extract_strided_slice %508 {offsets = [0, 32], sizes = [2, 32], strides = [1, 1]} : vector<2x128xf32> to vector<2x32xf32>
    %519 = arith.addf %506, %518 : vector<2x32xf32>
    %cst_146 = arith.constant 5.000000e-01 : f32
    %520 = vector.broadcast %cst_146 : f32 to vector<2x32xf32>
    %521 = arith.mulf %520, %519 : vector<2x32xf32>
    %522 = math.tanh %521 : vector<2x32xf32>
    %cst_147 = arith.constant 1.000000e+00 : f32
    %523 = vector.broadcast %cst_147 : f32 to vector<2x32xf32>
    %524 = arith.addf %522, %523 : vector<2x32xf32>
    %cst_148 = arith.constant 5.000000e-01 : f32
    %525 = vector.broadcast %cst_148 : f32 to vector<2x32xf32>
    %526 = arith.mulf %525, %524 : vector<2x32xf32>
    %527 = vector.extract_strided_slice %508 {offsets = [0, 64], sizes = [2, 32], strides = [1, 1]} : vector<2x128xf32> to vector<2x32xf32>
    %528 = arith.addf %527, %281 : vector<2x32xf32>
    %529 = arith.mulf %517, %528 : vector<2x32xf32>
    %530 = arith.addf %507, %529 : vector<2x32xf32>
    %531 = math.tanh %530 : vector<2x32xf32>
    %cst_149 = arith.constant 1.000000e+00 : f32
    %532 = vector.broadcast %cst_149 : f32 to vector<2x32xf32>
    %533 = arith.subf %532, %526 : vector<2x32xf32>
    %534 = arith.mulf %533, %531 : vector<2x32xf32>
    %535 = arith.mulf %526, %503 : vector<2x32xf32>
    %536 = arith.addf %534, %535 : vector<2x32xf32>
    %c0_150 = arith.constant 0 : index
    %c0_151 = arith.constant 0 : index
    %537 = vector.load %arg7[%c0_150, %c0_151] : memref<2x32xf32, #tpu.memory_space<vmem>>, vector<2x32xf32>
    tpu.vector_store %arg7[%c0_150, %c0_151], %536 {strides = array<i32>} : memref<2x32xf32, #tpu.memory_space<vmem>>, vector<2x32xf32>,
    return
  }
  func.func @transform_0(%arg0: i32) -> (i32, i32, i32) {
    %c0_i32 = arith.constant 0 : i32
    %c0_i32_0 = arith.constant 0 : i32
    %c0_i32_1 = arith.constant 0 : i32
    return %c0_i32, %arg0, %c0_i32_0 : i32, i32, i32
  }
  func.func @transform_1(%arg0: i32) -> (i32, i32) {
    %c0_i32 = arith.constant 0 : i32
    %c0_i32_0 = arith.constant 0 : i32
    %c0_i32_1 = arith.constant 0 : i32
    return %c0_i32, %c0_i32_0 : i32, i32
  }
  func.func @transform_2(%arg0: i32) -> (i32, i32) {
    %c0_i32 = arith.constant 0 : i32
    %c0_i32_0 = arith.constant 0 : i32
    %c0_i32_1 = arith.constant 0 : i32
    return %c0_i32, %c0_i32_0 : i32, i32
  }
  func.func @transform_3(%arg0: i32) -> (i32, i32, i32) {
    %c0_i32 = arith.constant 0 : i32
    %c0_i32_0 = arith.constant 0 : i32
    %c0_i32_1 = arith.constant 0 : i32
    %c0_i32_2 = arith.constant 0 : i32
    return %c0_i32, %c0_i32_0, %c0_i32_1 : i32, i32, i32
  }
  func.func @transform_4(%arg0: i32) -> (i32, i32, i32) {
    %c0_i32 = arith.constant 0 : i32
    %c0_i32_0 = arith.constant 0 : i32
    %c0_i32_1 = arith.constant 0 : i32
    %c0_i32_2 = arith.constant 0 : i32
    return %c0_i32, %c0_i32_0, %c0_i32_1 : i32, i32, i32
  }
  func.func @transform_5(%arg0: i32) -> (i32, i32, i32) {
    %c0_i32 = arith.constant 0 : i32
    %c0_i32_0 = arith.constant 0 : i32
    %c0_i32_1 = arith.constant 0 : i32
    %c0_i32_2 = arith.constant 0 : i32
    return %c0_i32, %c0_i32_0, %c0_i32_1 : i32, i32, i32
  }
  func.func @transform_6(%arg0: i32) -> (i32, i32) {
    %c0_i32 = arith.constant 0 : i32
    %c0_i32_0 = arith.constant 0 : i32
    return %arg0, %c0_i32 : i32, i32
  }
}

</mosaic_0001>

<llo_original>
// kernel: tpu_custom_call.1
$region0: #{tpu_custom_call.1}
  #allocation0 [shape = 'u32[]', space=smem, size = 0x4, offset = 0x4, fixed_abs, tag = 'smem constant byte address 0x4 - core index']
  #allocation1 [shape = 'u32[72,128]{1,0:T(1,128)}', space=vmem, size = 0x9000, scoped, tag = 'internal scratch']
  %s0 = inlined_call_operand.vmem [shape: f32[8,2,6], index: 0, kind: input, shape index: {}]
  %s1 = inlined_call_operand.vmem [shape: f32[6,128], index: 1, kind: input, shape index: {}]
  %s2 = inlined_call_operand.hbm [shape: f32[32,128], index: 2, kind: input, shape index: {}]
  %s3 = inlined_call_operand.hbm [shape: f32[2,32,128], index: 3, kind: input, shape index: {}]
  %s4 = inlined_call_operand.vmem [shape: f32[2,1,128], index: 4, kind: input, shape index: {}]
  %s5 = inlined_call_operand.vmem [shape: f32[2,1,32], index: 5, kind: input, shape index: {}]
  %s6 = inlined_call_operand.hbm [shape: f32[2,32], index: 6, kind: output, shape index: {}]
  %s7 = sld [smem:[#allocation0]]
  $region42: #{tpu_custom_call.1} parent=0
    _
  %s9 = ssub.s32 1, %s7
  %s10 = scalar_select 0, %s9, %s7
  $region1: #{tpu_custom_call.1} parent=0
    #allocation2 [shape = 'u8[16384]{0}', space=vmem, size = 0x4000, scoped, tag = 'input window, operand 2, single buffered']
    #allocation3 [shape = 's32[1]{0}', space=sflag, size = 0x4, scoped, tag = 'scoped memory for tpu_custom_call.1']
    #allocation4 [shape = 's32[1]{0}', space=sflag, size = 0x4, scoped, tag = 'scoped memory for tpu_custom_call.1']
    #allocation5 [shape = 'u8[32768]{0}', space=vmem, size = 0x8000, scoped, tag = 'input window, operand 3, single buffered']
    #allocation6 [shape = 's32[1]{0}', space=sflag, size = 0x4, scoped, tag = 'scoped memory for tpu_custom_call.1']
    #allocation7 [shape = 'u8[1024]{0}', space=vmem, size = 0x400, scoped, tag = 'output window, operand 0, single buffered']
    %11 = vsyncpa [#allocation3], 0
    %12 = vsyncpa [#allocation6], 0
    %13 = vsyncpa [#allocation4], 0
    // Predicated region
    $region2: #{tpu_custom_call.1} parent=1 // pred_check
      _
    $region3: #{tpu_custom_call.1} parent=1 // pred_check_branch
      %15 = sbr.rel (0) target = $region5
    $region4: #{tpu_custom_call.1} parent=1 // pred_region
      _
    $region5: #{tpu_custom_call.1} parent=1 // pred_fallthru
      _
    // Predicated region
    $region6: #{tpu_custom_call.1} parent=1 // pred_check
      _
    $region7: #{tpu_custom_call.1} parent=1 // pred_check_branch
      %17 = sbr.rel (0) target = $region9
    $region8: #{tpu_custom_call.1} parent=1 // pred_region
      _
    $region9: #{tpu_custom_call.1} parent=1 // pred_fallthru
      _
    // Predicated region
    $region10: #{tpu_custom_call.1} parent=1 // pred_check
      _
    $region11: #{tpu_custom_call.1} parent=1 // pred_check_branch
      %19 = sbr.rel (0) target = $region13
    $region12: #{tpu_custom_call.1} parent=1 // pred_region
      %21 = vsyncadd [#allocation3], 0
      %s22 = sshll.u32 %s2, 4
      %s23 = int_to_ptr.hbm [resolvable:$true] %s22
      %s24 = sshll.u32 [#allocation2], 4
      %s25 = int_to_ptr.vmem [resolvable:$true] %s24
      %30 = dma.hbm_to_vmem [thread:$0]  %s23, 512, %s25, [#allocation3], 128, 128, 8
    $region13: #{tpu_custom_call.1} parent=1 // pred_fallthru
      _
    // Predicated region
    $region14: #{tpu_custom_call.1} parent=1 // pred_check
      _
    $region15: #{tpu_custom_call.1} parent=1 // pred_check_branch
      %32 = sbr.rel (0) target = $region17
    $region16: #{tpu_custom_call.1} parent=1 // pred_region
      %34 = vsyncadd [#allocation6], 0
      %s35 = sshll.u32 %s3, 4
      %s36 = int_to_ptr.hbm [resolvable:$true] %s35
      %s37 = sshll.u32 [#allocation5], 4
      %s38 = int_to_ptr.vmem [resolvable:$true] %s37
      %43 = dma.hbm_to_vmem [thread:$0]  %s36, 1024, %s38, [#allocation6], 128, 128, 8
    $region17: #{tpu_custom_call.1} parent=1 // pred_fallthru
      _
    // Predicated region
    $region18: #{tpu_custom_call.1} parent=1 // pred_check
      _
    $region19: #{tpu_custom_call.1} parent=1 // pred_check_branch
      %45 = sbr.rel (0) target = $region21
    $region20: #{tpu_custom_call.1} parent=1 // pred_region
      _
    $region21: #{tpu_custom_call.1} parent=1 // pred_fallthru
      _
    // Predicated region
    $region22: #{tpu_custom_call.1} parent=1 // pred_check
      _
    $region23: #{tpu_custom_call.1} parent=1 // pred_check_branch
      %47 = sbr.rel (0) target = $region25
    $region24: #{tpu_custom_call.1} parent=1 // pred_region
      _
    $region25: #{tpu_custom_call.1} parent=1 // pred_fallthru
      _
    // Predicated region
    $region26: #{tpu_custom_call.1} parent=1 // pred_check
      _
    $region27: #{tpu_custom_call.1} parent=1 // pred_check_branch
      %49 = sbr.rel (0) target = $region29
    $region28: #{tpu_custom_call.1} parent=1 // pred_region
      %51 = dma.done [#allocation3], 512
    $region29: #{tpu_custom_call.1} parent=1 // pred_fallthru
      _
    // Predicated region
    $region30: #{tpu_custom_call.1} parent=1 // pred_check
      _
    $region31: #{tpu_custom_call.1} parent=1 // pred_check_branch
      %53 = sbr.rel (0) target = $region33
    $region32: #{tpu_custom_call.1} parent=1 // pred_region
      %55 = dma.done [#allocation6], 1024
    $region33: #{tpu_custom_call.1} parent=1 // pred_fallthru
      _
    %v56 = vld [vmem:[%s0] sm:$0x3]
    %v57 = vld [vmem:[%s0 + $0x2] sm:$0x3]
    %v58 = vld [vmem:[%s0 + $0x4] sm:$0x3]
    %v59 = vld [vmem:[%s0 + $0x6] sm:$0x3]
    %v60 = vld [vmem:[%s0 + $0x8] sm:$0x3]
    %v61 = vld [vmem:[%s0 + $0xa] sm:$0x3]
    %v62 = vld [vmem:[%s0 + $0xc] sm:$0x3]
    %v63 = vld [vmem:[%s0 + $0xe] sm:$0x3]
    %v64 = vld [vmem:[%s1] sm:$0x3f]
    %v65 = vld [vmem:[#allocation5] sm:$0xff]
    %v66 = vld [vmem:[#allocation5 + $0x8] sm:$0xff]
    %v67 = vld [vmem:[#allocation5 + $0x10] sm:$0xff]
    %v68 = vld [vmem:[#allocation5 + $0x18] sm:$0xff]
    %v69 = vld [vmem:[%s4] sm:$0x1]
    %v71 = vperm.slane %v69, 0
    %81 = vst [vmem:[#allocation1] ss:$4 sm:$0xff] %v56
    %s82 = scalar_lea.vmem [#allocation1], 1
    %83 = vst [vmem:[%s82] ss:$4 sm:$0xff] %v57
    %s84 = scalar_lea.vmem [#allocation1], 2
    %85 = vst [vmem:[%s84] ss:$4 sm:$0xff] %v58
    %s86 = scalar_lea.vmem [#allocation1], 3
    %87 = vst [vmem:[%s86] ss:$4 sm:$0xff] %v59
    %s88 = scalar_lea.vmem [#allocation1], 32
    %89 = vst [vmem:[%s88] ss:$4 sm:$0xff] %v60
    %s90 = scalar_lea.vmem [#allocation1], 33
    %91 = vst [vmem:[%s90] ss:$4 sm:$0xff] %v61
    %s92 = scalar_lea.vmem [#allocation1], 34
    %93 = vst [vmem:[%s92] ss:$4 sm:$0xff] %v62
    %s94 = scalar_lea.vmem [#allocation1], 35
    %95 = vst [vmem:[%s94] ss:$4 sm:$0xff] %v63
    %v96 = vld.sshfl [vmem:[#allocation1] sm:$0xff pattern:$0x73625140]
    %v97 = vld.sshfl [vmem:[#allocation1 + $0x20] sm:$0xff pattern:$0x73625140]
    %vm98 = vcmask 48128
    %v99 = vsel %vm98, %v96, 0
    %v101 = vsel %vm98, %v97, 0
    %vm103 = vcmask 1045504
    %v105 = vsel %vm103, %v64, 0
    %107 = vmatpush.msra.mxu0 0.0
    %108 = vmatpush.msra.mxu0 0.0
    %109 = vmatpush.msra.mxu0 0.0
    %110 = vmatpush.msra.mxu0 0.0
    %111 = vmatpush.msra.mxu0 0.0
    %112 = vmatpush.msra.mxu0 0.0
    %113 = vmatpush.msra.mxu0 0.0
    %114 = vmatpush.msra.mxu0 0.0
    %115 = vmatpush.msra.mxu0 0.0
    %116 = vmatpush.msra.mxu0 0.0
    %117 = vmatpush.msra.mxu0 0.0
    %118 = vmatpush.msra.mxu0 0.0
    %119 = vmatpush.msra.mxu0 0.0
    %120 = vmatpush.msra.mxu0 0.0
    %121 = vmatpush.msra.mxu0 0.0
    %122 = vmatpush.msra.mxu0 %v105
    %123 = vmatmul.f32.gmra.mxu0 %v99
    %v124 = vpop.f32.mrf.mxu0
    %v125 = vadd.f32 %v71, %v124
    %126 = vmatmul.f32.gmra.mxu0 %v101
    %v127 = vpop.f32.mrf.mxu0
    %v128 = vadd.f32 %v71, %v127
    %129 = vdwg.mxu0
    %v130 = vld [vmem:[%s5] sm:$0x1]
    %v132 = vperm.slane %v130, 0
    %v134 = vmul.f32 %v125, 0.5
    %v135 = vtanh.pop %v134
    %v136 = vadd.f32 %v135, 1.0
    %v137 = vmul.f32 %v136, 0.5
    %v138 = vmul.f32 %v137, %v132
    %140 = vrot.lane.b32.xlu0 %v138, 64
    %v141 = vpop.permute.xlu0 %140
    %v143 = vadd.f32 %v125, %v141
    %v144 = vtanh.pop %v143
    %v145 = vsub.f32 1.0, %v137
    %147 = vrot.lane.b32.xlu0 %v144, 96
    %v148 = vpop.permute.xlu0 %147
    %v150 = vmul.f32 %v145, %v148
    %152 = vrot.lane.b32.xlu0 %v150, 96
    %v153 = vpop.permute.xlu0 %152
    %vm154 = vcmask 261120
    %v155 = vsel %vm154, %v153, 0
    %157 = vmatpush.msra.mxu0 0.0
    %158 = vmatpush.msra.mxu0 0.0
    %159 = vmatpush.msra.mxu0 0.0
    %160 = vmatpush.msra.mxu0 0.0
    %161 = vmatpush.msra.mxu0 0.0
    %162 = vmatpush.msra.mxu0 0.0
    %163 = vmatpush.msra.mxu0 0.0
    %164 = vmatpush.msra.mxu0 0.0
    %165 = vmatpush.msra.mxu0 0.0
    %166 = vmatpush.msra.mxu0 0.0
    %167 = vmatpush.msra.mxu0 0.0
    %168 = vmatpush.msra.mxu0 0.0
    %169 = vmatpush.msra.mxu0 %v68
    %170 = vmatpush.msra.mxu0 %v67
    %171 = vmatpush.msra.mxu0 %v66
    %172 = vmatpush.msra.mxu0 %v65
    %173 = vmatmul.f32.gmra.mxu0 %v155
    %v174 = vpop.f32.mrf.mxu0
    %v175 = vadd.f32 0.0, %v174
    %176 = vdwg.mxu0
    %v178 = vrot.slane %v175, 6
    %v180 = vadd.f32 %v125, %v178
    %v181 = vmul.f32 %v180, 0.5
    %v182 = vtanh.pop %v181
    %v183 = vadd.f32 %v182, 1.0
    %v184 = vmul.f32 %v183, 0.5
    %185 = vrot.lane.b32.xlu0 %v132, 64
    %v186 = vpop.permute.xlu0 %185
    %v188 = vadd.f32 %v175, %v186
    %v190 = vrot.slane %v188, 6
    %191 = vrot.lane.b32.xlu0 %v190, 64
    %v192 = vpop.permute.xlu0 %191
    %v194 = vmul.f32 %v184, %v192
    %196 = vrot.lane.b32.xlu0 %v194, 64
    %v197 = vpop.permute.xlu0 %196
    %v199 = vadd.f32 %v125, %v197
    %v200 = vtanh.pop %v199
    %v201 = vsub.f32 1.0, %v184
    %203 = vrot.lane.b32.xlu0 %v200, 96
    %v204 = vpop.permute.xlu0 %203
    %v206 = vmul.f32 %v201, %v204
    %v207 = vrot.slane %v150, 6
    %v209 = vmul.f32 %v184, %v207
    %v210 = vadd.f32 %v206, %v209
    %v212 = vrot.slane %v210, 2
    %213 = vrot.lane.b32.xlu0 %v212, 96
    %v214 = vpop.permute.xlu0 %213
    %v215 = vsel %vm154, %v214, 0
    %217 = vmatpush.msra.mxu0 0.0
    %218 = vmatpush.msra.mxu0 0.0
    %219 = vmatpush.msra.mxu0 0.0
    %220 = vmatpush.msra.mxu0 0.0
    %221 = vmatpush.msra.mxu0 0.0
    %222 = vmatpush.msra.mxu0 0.0
    %223 = vmatpush.msra.mxu0 0.0
    %224 = vmatpush.msra.mxu0 0.0
    %225 = vmatpush.msra.mxu0 0.0
    %226 = vmatpush.msra.mxu0 0.0
    %227 = vmatpush.msra.mxu0 0.0
    %228 = vmatpush.msra.mxu0 0.0
    %229 = vmatpush.msra.mxu0 %v68
    %230 = vmatpush.msra.mxu0 %v67
    %231 = vmatpush.msra.mxu0 %v66
    %232 = vmatpush.msra.mxu0 %v65
    %233 = vmatmul.f32.gmra.mxu0 %v215
    %v234 = vpop.f32.mrf.mxu0
    %v235 = vadd.f32 0.0, %v234
    %236 = vdwg.mxu0
    %v238 = vrot.slane %v235, 4
    %v240 = vadd.f32 %v125, %v238
    %v241 = vmul.f32 %v240, 0.5
    %v242 = vtanh.pop %v241
    %v243 = vadd.f32 %v242, 1.0
    %v244 = vmul.f32 %v243, 0.5
    %v245 = vadd.f32 %v235, %v186
    %v247 = vrot.slane %v245, 4
    %248 = vrot.lane.b32.xlu0 %v247, 64
    %v249 = vpop.permute.xlu0 %248
    %v251 = vmul.f32 %v244, %v249
    %253 = vrot.lane.b32.xlu0 %v251, 64
    %v254 = vpop.permute.xlu0 %253
    %v256 = vadd.f32 %v125, %v254
    %v257 = vtanh.pop %v256
    %v258 = vsub.f32 1.0, %v244
    %260 = vrot.lane.b32.xlu0 %v257, 96
    %v261 = vpop.permute.xlu0 %260
    %v263 = vmul.f32 %v258, %v261
    %v264 = vrot.slane %v210, 6
    %v266 = vmul.f32 %v244, %v264
    %v267 = vadd.f32 %v263, %v266
    %v269 = vrot.slane %v267, 4
    %270 = vrot.lane.b32.xlu0 %v269, 96
    %v271 = vpop.permute.xlu0 %270
    %v272 = vsel %vm154, %v271, 0
    %274 = vmatpush.msra.mxu0 0.0
    %275 = vmatpush.msra.mxu0 0.0
    %276 = vmatpush.msra.mxu0 0.0
    %277 = vmatpush.msra.mxu0 0.0
    %278 = vmatpush.msra.mxu0 0.0
    %279 = vmatpush.msra.mxu0 0.0
    %280 = vmatpush.msra.mxu0 0.0
    %281 = vmatpush.msra.mxu0 0.0
    %282 = vmatpush.msra.mxu0 0.0
    %283 = vmatpush.msra.mxu0 0.0
    %284 = vmatpush.msra.mxu0 0.0
    %285 = vmatpush.msra.mxu0 0.0
    %286 = vmatpush.msra.mxu0 %v68
    %287 = vmatpush.msra.mxu0 %v67
    %288 = vmatpush.msra.mxu0 %v66
    %289 = vmatpush.msra.mxu0 %v65
    %290 = vmatmul.f32.gmra.mxu0 %v272
    %v291 = vpop.f32.mrf.mxu0
    %v292 = vadd.f32 0.0, %v291
    %293 = vdwg.mxu0
    %v295 = vrot.slane %v292, 2
    %v297 = vadd.f32 %v125, %v295
    %v298 = vmul.f32 %v297, 0.5
    %v299 = vtanh.pop %v298
    %v300 = vadd.f32 %v299, 1.0
    %v301 = vmul.f32 %v300, 0.5
    %v302 = vadd.f32 %v292, %v186
    %v304 = vrot.slane %v302, 2
    %305 = vrot.lane.b32.xlu0 %v304, 64
    %v306 = vpop.permute.xlu0 %305
    %v308 = vmul.f32 %v301, %v306
    %310 = vrot.lane.b32.xlu0 %v308, 64
    %v311 = vpop.permute.xlu0 %310
    %v313 = vadd.f32 %v125, %v311
    %v314 = vtanh.pop %v313
    %v315 = vsub.f32 1.0, %v301
    %317 = vrot.lane.b32.xlu0 %v314, 96
    %v318 = vpop.permute.xlu0 %317
    %v320 = vmul.f32 %v315, %v318
    %v321 = vrot.slane %v267, 6
    %v323 = vmul.f32 %v301, %v321
    %v324 = vadd.f32 %v320, %v323
    %v326 = vrot.slane %v324, 6
    %327 = vrot.lane.b32.xlu0 %v326, 96
    %v328 = vpop.permute.xlu0 %327
    %v329 = vsel %vm154, %v328, 0
    %331 = vmatpush.msra.mxu0 0.0
    %332 = vmatpush.msra.mxu0 0.0
    %333 = vmatpush.msra.mxu0 0.0
    %334 = vmatpush.msra.mxu0 0.0
    %335 = vmatpush.msra.mxu0 0.0
    %336 = vmatpush.msra.mxu0 0.0
    %337 = vmatpush.msra.mxu0 0.0
    %338 = vmatpush.msra.mxu0 0.0
    %339 = vmatpush.msra.mxu0 0.0
    %340 = vmatpush.msra.mxu0 0.0
    %341 = vmatpush.msra.mxu0 0.0
    %342 = vmatpush.msra.mxu0 0.0
    %343 = vmatpush.msra.mxu0 %v68
    %344 = vmatpush.msra.mxu0 %v67
    %345 = vmatpush.msra.mxu0 %v66
    %346 = vmatpush.msra.mxu0 %v65
    %347 = vmatmul.f32.gmra.mxu0 %v329
    %v348 = vpop.f32.mrf.mxu0
    %v349 = vadd.f32 0.0, %v348
    %350 = vdwg.mxu0
    %v351 = vadd.f32 %v128, %v349
    %v352 = vmul.f32 %v351, 0.5
    %v353 = vtanh.pop %v352
    %v354 = vadd.f32 %v353, 1.0
    %v355 = vmul.f32 %v354, 0.5
    %v356 = vadd.f32 %v349, %v186
    %358 = vrot.lane.b32.xlu0 %v356, 64
    %v359 = vpop.permute.xlu0 %358
    %v361 = vmul.f32 %v355, %v359
    %363 = vrot.lane.b32.xlu0 %v361, 64
    %v364 = vpop.permute.xlu0 %363
    %v366 = vadd.f32 %v128, %v364
    %v367 = vtanh.pop %v366
    %v368 = vsub.f32 1.0, %v355
    %370 = vrot.lane.b32.xlu0 %v367, 96
    %v371 = vpop.permute.xlu0 %370
    %v373 = vmul.f32 %v368, %v371
    %v375 = vmul.f32 %v355, %v326
    %v376 = vadd.f32 %v373, %v375
    %378 = vrot.lane.b32.xlu0 %v376, 96
    %v379 = vpop.permute.xlu0 %378
    %v380 = vsel %vm154, %v379, 0
    %382 = vmatpush.msra.mxu0 0.0
    %383 = vmatpush.msra.mxu0 0.0
    %384 = vmatpush.msra.mxu0 0.0
    %385 = vmatpush.msra.mxu0 0.0
    %386 = vmatpush.msra.mxu0 0.0
    %387 = vmatpush.msra.mxu0 0.0
    %388 = vmatpush.msra.mxu0 0.0
    %389 = vmatpush.msra.mxu0 0.0
    %390 = vmatpush.msra.mxu0 0.0
    %391 = vmatpush.msra.mxu0 0.0
    %392 = vmatpush.msra.mxu0 0.0
    %393 = vmatpush.msra.mxu0 0.0
    %394 = vmatpush.msra.mxu0 %v68
    %395 = vmatpush.msra.mxu0 %v67
    %396 = vmatpush.msra.mxu0 %v66
    %397 = vmatpush.msra.mxu0 %v65
    %398 = vmatmul.f32.gmra.mxu0 %v380
    %v399 = vpop.f32.mrf.mxu0
    %v400 = vadd.f32 0.0, %v399
    %401 = vdwg.mxu0
    %v403 = vrot.slane %v400, 6
    %v405 = vadd.f32 %v128, %v403
    %v406 = vmul.f32 %v405, 0.5
    %v407 = vtanh.pop %v406
    %v408 = vadd.f32 %v407, 1.0
    %v409 = vmul.f32 %v408, 0.5
    %v410 = vadd.f32 %v400, %v186
    %v412 = vrot.slane %v410, 6
    %413 = vrot.lane.b32.xlu0 %v412, 64
    %v414 = vpop.permute.xlu0 %413
    %v416 = vmul.f32 %v409, %v414
    %418 = vrot.lane.b32.xlu0 %v416, 64
    %v419 = vpop.permute.xlu0 %418
    %v421 = vadd.f32 %v128, %v419
    %v422 = vtanh.pop %v421
    %v423 = vsub.f32 1.0, %v409
    %425 = vrot.lane.b32.xlu0 %v422, 96
    %v426 = vpop.permute.xlu0 %425
    %v428 = vmul.f32 %v423, %v426
    %v429 = vrot.slane %v376, 6
    %v431 = vmul.f32 %v409, %v429
    %v432 = vadd.f32 %v428, %v431
    %v434 = vrot.slane %v432, 2
    %435 = vrot.lane.b32.xlu0 %v434, 96
    %v436 = vpop.permute.xlu0 %435
    %v437 = vsel %vm154, %v436, 0
    %439 = vmatpush.msra.mxu0 0.0
    %440 = vmatpush.msra.mxu0 0.0
    %441 = vmatpush.msra.mxu0 0.0
    %442 = vmatpush.msra.mxu0 0.0
    %443 = vmatpush.msra.mxu0 0.0
    %444 = vmatpush.msra.mxu0 0.0
    %445 = vmatpush.msra.mxu0 0.0
    %446 = vmatpush.msra.mxu0 0.0
    %447 = vmatpush.msra.mxu0 0.0
    %448 = vmatpush.msra.mxu0 0.0
    %449 = vmatpush.msra.mxu0 0.0
    %450 = vmatpush.msra.mxu0 0.0
    %451 = vmatpush.msra.mxu0 %v68
    %452 = vmatpush.msra.mxu0 %v67
    %453 = vmatpush.msra.mxu0 %v66
    %454 = vmatpush.msra.mxu0 %v65
    %455 = vmatmul.f32.gmra.mxu0 %v437
    %v456 = vpop.f32.mrf.mxu0
    %v457 = vadd.f32 0.0, %v456
    %458 = vdwg.mxu0
    %v460 = vrot.slane %v457, 4
    %v462 = vadd.f32 %v128, %v460
    %v463 = vmul.f32 %v462, 0.5
    %v464 = vtanh.pop %v463
    %v465 = vadd.f32 %v464, 1.0
    %v466 = vmul.f32 %v465, 0.5
    %v467 = vadd.f32 %v457, %v186
    %v469 = vrot.slane %v467, 4
    %470 = vrot.lane.b32.xlu0 %v469, 64
    %v471 = vpop.permute.xlu0 %470
    %v473 = vmul.f32 %v466, %v471
    %475 = vrot.lane.b32.xlu0 %v473, 64
    %v476 = vpop.permute.xlu0 %475
    %v478 = vadd.f32 %v128, %v476
    %v479 = vtanh.pop %v478
    %v480 = vsub.f32 1.0, %v466
    %482 = vrot.lane.b32.xlu0 %v479, 96
    %v483 = vpop.permute.xlu0 %482
    %v485 = vmul.f32 %v480, %v483
    %v486 = vrot.slane %v432, 6
    %v488 = vmul.f32 %v466, %v486
    %v489 = vadd.f32 %v485, %v488
    %v491 = vrot.slane %v489, 4
    %492 = vrot.lane.b32.xlu0 %v491, 96
    %v493 = vpop.permute.xlu0 %492
    %v494 = vsel %vm154, %v493, 0
    %496 = vmatpush.msra.mxu0 0.0
    %497 = vmatpush.msra.mxu0 0.0
    %498 = vmatpush.msra.mxu0 0.0
    %499 = vmatpush.msra.mxu0 0.0
    %500 = vmatpush.msra.mxu0 0.0
    %501 = vmatpush.msra.mxu0 0.0
    %502 = vmatpush.msra.mxu0 0.0
    %503 = vmatpush.msra.mxu0 0.0
    %504 = vmatpush.msra.mxu0 0.0
    %505 = vmatpush.msra.mxu0 0.0
    %506 = vmatpush.msra.mxu0 0.0
    %507 = vmatpush.msra.mxu0 0.0
    %508 = vmatpush.msra.mxu0 %v68
    %509 = vmatpush.msra.mxu0 %v67
    %510 = vmatpush.msra.mxu0 %v66
    %511 = vmatpush.msra.mxu0 %v65
    %512 = vmatmul.f32.gmra.mxu0 %v494
    %v513 = vpop.f32.mrf.mxu0
    %v514 = vadd.f32 0.0, %v513
    %515 = vdwg.mxu0
    %v517 = vrot.slane %v514, 2
    %v519 = vadd.f32 %v128, %v517
    %v520 = vmul.f32 %v519, 0.5
    %v521 = vtanh.pop %v520
    %v522 = vadd.f32 %v521, 1.0
    %v523 = vmul.f32 %v522, 0.5
    %v524 = vadd.f32 %v514, %v186
    %v526 = vrot.slane %v524, 2
    %527 = vrot.lane.b32.xlu0 %v526, 64
    %v528 = vpop.permute.xlu0 %527
    %v530 = vmul.f32 %v523, %v528
    %532 = vrot.lane.b32.xlu0 %v530, 64
    %v533 = vpop.permute.xlu0 %532
    %v535 = vadd.f32 %v128, %v533
    %v536 = vtanh.pop %v535
    %v537 = vsub.f32 1.0, %v523
    %539 = vrot.lane.b32.xlu0 %v536, 96
    %v540 = vpop.permute.xlu0 %539
    %v542 = vmul.f32 %v537, %v540
    %v543 = vrot.slane %v489, 6
    %v545 = vmul.f32 %v523, %v543
    %v546 = vadd.f32 %v542, %v545
    %vm547 = vcmask 1041408
    %v548 = vsel %vm547, %v150, %v210
    %vm549 = vcmask 1043456
    %v550 = vsel %vm549, %v548, %v267
    %v551 = vsel %vm103, %v550, %v324
    %v552 = vsel %vm547, %v376, %v432
    %v553 = vsel %vm549, %v552, %v489
    %v554 = vsel %vm103, %v553, %v546
    %v555 = vld [vmem:[#allocation2] sm:$0xff]
    %v556 = vld [vmem:[#allocation2 + $0x8] sm:$0xff]
    %v557 = vld [vmem:[#allocation2 + $0x10] sm:$0xff]
    %v558 = vld [vmem:[#allocation2 + $0x18] sm:$0xff]
    %s559 = scalar_lea.vmem [#allocation5], 32
    %v560 = vld [vmem:[%s559] sm:$0xff]
    %v561 = vld [vmem:[%s559 + $0x8] sm:$0xff]
    %v562 = vld [vmem:[%s559 + $0x10] sm:$0xff]
    %v563 = vld [vmem:[%s559 + $0x18] sm:$0xff]
    %s564 = scalar_lea.vmem %s4, 1
    %v565 = vld [vmem:[%s564] sm:$0x1]
    %v567 = vperm.slane %v565, 0
    %571 = vrot.lane.b32.xlu0 %v551, 96
    %v572 = vpop.permute.xlu0 %571
    %573 = vrot.lane.b32.xlu0 %v554, 96
    %v574 = vpop.permute.xlu0 %573
    %v575 = vsel %vm154, %v572, 0
    %v577 = vsel %vm154, %v574, 0
    %579 = vmatpush.msra.mxu0 0.0
    %580 = vmatpush.msra.mxu0 0.0
    %581 = vmatpush.msra.mxu0 0.0
    %582 = vmatpush.msra.mxu0 0.0
    %583 = vmatpush.msra.mxu0 0.0
    %584 = vmatpush.msra.mxu0 0.0
    %585 = vmatpush.msra.mxu0 0.0
    %586 = vmatpush.msra.mxu0 0.0
    %587 = vmatpush.msra.mxu0 0.0
    %588 = vmatpush.msra.mxu0 0.0
    %589 = vmatpush.msra.mxu0 0.0
    %590 = vmatpush.msra.mxu0 0.0
    %591 = vmatpush.msra.mxu0 %v558
    %592 = vmatpush.msra.mxu0 %v557
    %593 = vmatpush.msra.mxu0 %v556
    %594 = vmatpush.msra.mxu0 %v555
    %595 = vmatmul.f32.gmra.mxu0 %v575
    %v596 = vpop.f32.mrf.mxu0
    %v597 = vadd.f32 %v567, %v596
    %598 = vmatmul.f32.gmra.mxu0 %v577
    %v599 = vpop.f32.mrf.mxu0
    %v600 = vadd.f32 %v567, %v599
    %601 = vdwg.mxu0
    %s602 = scalar_lea.vmem %s5, 1
    %v603 = vld [vmem:[%s602] sm:$0x1]
    %v605 = vperm.slane %v603, 0
    %v607 = vmul.f32 %v597, 0.5
    %v608 = vtanh.pop %v607
    %v609 = vadd.f32 %v608, 1.0
    %v610 = vmul.f32 %v609, 0.5
    %v611 = vmul.f32 %v610, %v605
    %613 = vrot.lane.b32.xlu0 %v611, 64
    %v614 = vpop.permute.xlu0 %613
    %v616 = vadd.f32 %v597, %v614
    %v617 = vtanh.pop %v616
    %v618 = vsub.f32 1.0, %v610
    %620 = vrot.lane.b32.xlu0 %v617, 96
    %v621 = vpop.permute.xlu0 %620
    %v623 = vmul.f32 %v618, %v621
    %625 = vrot.lane.b32.xlu0 %v623, 96
    %v626 = vpop.permute.xlu0 %625
    %v627 = vsel %vm154, %v626, 0
    %629 = vmatpush.msra.mxu0 0.0
    %630 = vmatpush.msra.mxu0 0.0
    %631 = vmatpush.msra.mxu0 0.0
    %632 = vmatpush.msra.mxu0 0.0
    %633 = vmatpush.msra.mxu0 0.0
    %634 = vmatpush.msra.mxu0 0.0
    %635 = vmatpush.msra.mxu0 0.0
    %636 = vmatpush.msra.mxu0 0.0
    %637 = vmatpush.msra.mxu0 0.0
    %638 = vmatpush.msra.mxu0 0.0
    %639 = vmatpush.msra.mxu0 0.0
    %640 = vmatpush.msra.mxu0 0.0
    %641 = vmatpush.msra.mxu0 %v563
    %642 = vmatpush.msra.mxu0 %v562
    %643 = vmatpush.msra.mxu0 %v561
    %644 = vmatpush.msra.mxu0 %v560
    %645 = vmatmul.f32.gmra.mxu0 %v627
    %v646 = vpop.f32.mrf.mxu0
    %v647 = vadd.f32 0.0, %v646
    %648 = vdwg.mxu0
    %v650 = vrot.slane %v647, 6
    %v652 = vadd.f32 %v597, %v650
    %v653 = vmul.f32 %v652, 0.5
    %v654 = vtanh.pop %v653
    %v655 = vadd.f32 %v654, 1.0
    %v656 = vmul.f32 %v655, 0.5
    %657 = vrot.lane.b32.xlu0 %v605, 64
    %v658 = vpop.permute.xlu0 %657
    %v660 = vadd.f32 %v647, %v658
    %v662 = vrot.slane %v660, 6
    %663 = vrot.lane.b32.xlu0 %v662, 64
    %v664 = vpop.permute.xlu0 %663
    %v666 = vmul.f32 %v656, %v664
    %668 = vrot.lane.b32.xlu0 %v666, 64
    %v669 = vpop.permute.xlu0 %668
    %v671 = vadd.f32 %v597, %v669
    %v672 = vtanh.pop %v671
    %v673 = vsub.f32 1.0, %v656
    %675 = vrot.lane.b32.xlu0 %v672, 96
    %v676 = vpop.permute.xlu0 %675
    %v678 = vmul.f32 %v673, %v676
    %v679 = vrot.slane %v623, 6
    %v681 = vmul.f32 %v656, %v679
    %v682 = vadd.f32 %v678, %v681
    %v684 = vrot.slane %v682, 2
    %685 = vrot.lane.b32.xlu0 %v684, 96
    %v686 = vpop.permute.xlu0 %685
    %v687 = vsel %vm154, %v686, 0
    %689 = vmatpush.msra.mxu0 0.0
    %690 = vmatpush.msra.mxu0 0.0
    %691 = vmatpush.msra.mxu0 0.0
    %692 = vmatpush.msra.mxu0 0.0
    %693 = vmatpush.msra.mxu0 0.0
    %694 = vmatpush.msra.mxu0 0.0
    %695 = vmatpush.msra.mxu0 0.0
    %696 = vmatpush.msra.mxu0 0.0
    %697 = vmatpush.msra.mxu0 0.0
    %698 = vmatpush.msra.mxu0 0.0
    %699 = vmatpush.msra.mxu0 0.0
    %700 = vmatpush.msra.mxu0 0.0
    %701 = vmatpush.msra.mxu0 %v563
    %702 = vmatpush.msra.mxu0 %v562
    %703 = vmatpush.msra.mxu0 %v561
    %704 = vmatpush.msra.mxu0 %v560
    %705 = vmatmul.f32.gmra.mxu0 %v687
    %v706 = vpop.f32.mrf.mxu0
    %v707 = vadd.f32 0.0, %v706
    %708 = vdwg.mxu0
    %v710 = vrot.slane %v707, 4
    %v712 = vadd.f32 %v597, %v710
    %v713 = vmul.f32 %v712, 0.5
    %v714 = vtanh.pop %v713
    %v715 = vadd.f32 %v714, 1.0
    %v716 = vmul.f32 %v715, 0.5
    %v717 = vadd.f32 %v707, %v658
    %v719 = vrot.slane %v717, 4
    %720 = vrot.lane.b32.xlu0 %v719, 64
    %v721 = vpop.permute.xlu0 %720
    %v723 = vmul.f32 %v716, %v721
    %725 = vrot.lane.b32.xlu0 %v723, 64
    %v726 = vpop.permute.xlu0 %725
    %v728 = vadd.f32 %v597, %v726
    %v729 = vtanh.pop %v728
    %v730 = vsub.f32 1.0, %v716
    %732 = vrot.lane.b32.xlu0 %v729, 96
    %v733 = vpop.permute.xlu0 %732
    %v735 = vmul.f32 %v730, %v733
    %v736 = vrot.slane %v682, 6
    %v738 = vmul.f32 %v716, %v736
    %v739 = vadd.f32 %v735, %v738
    %v741 = vrot.slane %v739, 4
    %742 = vrot.lane.b32.xlu0 %v741, 96
    %v743 = vpop.permute.xlu0 %742
    %v744 = vsel %vm154, %v743, 0
    %746 = vmatpush.msra.mxu0 0.0
    %747 = vmatpush.msra.mxu0 0.0
    %748 = vmatpush.msra.mxu0 0.0
    %749 = vmatpush.msra.mxu0 0.0
    %750 = vmatpush.msra.mxu0 0.0
    %751 = vmatpush.msra.mxu0 0.0
    %752 = vmatpush.msra.mxu0 0.0
    %753 = vmatpush.msra.mxu0 0.0
    %754 = vmatpush.msra.mxu0 0.0
    %755 = vmatpush.msra.mxu0 0.0
    %756 = vmatpush.msra.mxu0 0.0
    %757 = vmatpush.msra.mxu0 0.0
    %758 = vmatpush.msra.mxu0 %v563
    %759 = vmatpush.msra.mxu0 %v562
    %760 = vmatpush.msra.mxu0 %v561
    %761 = vmatpush.msra.mxu0 %v560
    %762 = vmatmul.f32.gmra.mxu0 %v744
    %v763 = vpop.f32.mrf.mxu0
    %v764 = vadd.f32 0.0, %v763
    %765 = vdwg.mxu0
    %v767 = vrot.slane %v764, 2
    %v769 = vadd.f32 %v597, %v767
    %v770 = vmul.f32 %v769, 0.5
    %v771 = vtanh.pop %v770
    %v772 = vadd.f32 %v771, 1.0
    %v773 = vmul.f32 %v772, 0.5
    %v774 = vadd.f32 %v764, %v658
    %v776 = vrot.slane %v774, 2
    %777 = vrot.lane.b32.xlu0 %v776, 64
    %v778 = vpop.permute.xlu0 %777
    %v780 = vmul.f32 %v773, %v778
    %782 = vrot.lane.b32.xlu0 %v780, 64
    %v783 = vpop.permute.xlu0 %782
    %v785 = vadd.f32 %v597, %v783
    %v786 = vtanh.pop %v785
    %v787 = vsub.f32 1.0, %v773
    %789 = vrot.lane.b32.xlu0 %v786, 96
    %v790 = vpop.permute.xlu0 %789
    %v792 = vmul.f32 %v787, %v790
    %v793 = vrot.slane %v739, 6
    %v795 = vmul.f32 %v773, %v793
    %v796 = vadd.f32 %v792, %v795
    %v798 = vrot.slane %v796, 6
    %799 = vrot.lane.b32.xlu0 %v798, 96
    %v800 = vpop.permute.xlu0 %799
    %v801 = vsel %vm154, %v800, 0
    %803 = vmatpush.msra.mxu0 0.0
    %804 = vmatpush.msra.mxu0 0.0
    %805 = vmatpush.msra.mxu0 0.0
    %806 = vmatpush.msra.mxu0 0.0
    %807 = vmatpush.msra.mxu0 0.0
    %808 = vmatpush.msra.mxu0 0.0
    %809 = vmatpush.msra.mxu0 0.0
    %810 = vmatpush.msra.mxu0 0.0
    %811 = vmatpush.msra.mxu0 0.0
    %812 = vmatpush.msra.mxu0 0.0
    %813 = vmatpush.msra.mxu0 0.0
    %814 = vmatpush.msra.mxu0 0.0
    %815 = vmatpush.msra.mxu0 %v563
    %816 = vmatpush.msra.mxu0 %v562
    %817 = vmatpush.msra.mxu0 %v561
    %818 = vmatpush.msra.mxu0 %v560
    %819 = vmatmul.f32.gmra.mxu0 %v801
    %v820 = vpop.f32.mrf.mxu0
    %v821 = vadd.f32 0.0, %v820
    %822 = vdwg.mxu0
    %v823 = vadd.f32 %v600, %v821
    %v824 = vmul.f32 %v823, 0.5
    %v825 = vtanh.pop %v824
    %v826 = vadd.f32 %v825, 1.0
    %v827 = vmul.f32 %v826, 0.5
    %v828 = vadd.f32 %v821, %v658
    %830 = vrot.lane.b32.xlu0 %v828, 64
    %v831 = vpop.permute.xlu0 %830
    %v833 = vmul.f32 %v827, %v831
    %835 = vrot.lane.b32.xlu0 %v833, 64
    %v836 = vpop.permute.xlu0 %835
    %v838 = vadd.f32 %v600, %v836
    %v839 = vtanh.pop %v838
    %v840 = vsub.f32 1.0, %v827
    %842 = vrot.lane.b32.xlu0 %v839, 96
    %v843 = vpop.permute.xlu0 %842
    %v845 = vmul.f32 %v840, %v843
    %v847 = vmul.f32 %v827, %v798
    %v848 = vadd.f32 %v845, %v847
    %850 = vrot.lane.b32.xlu0 %v848, 96
    %v851 = vpop.permute.xlu0 %850
    %v852 = vsel %vm154, %v851, 0
    %854 = vmatpush.msra.mxu0 0.0
    %855 = vmatpush.msra.mxu0 0.0
    %856 = vmatpush.msra.mxu0 0.0
    %857 = vmatpush.msra.mxu0 0.0
    %858 = vmatpush.msra.mxu0 0.0
    %859 = vmatpush.msra.mxu0 0.0
    %860 = vmatpush.msra.mxu0 0.0
    %861 = vmatpush.msra.mxu0 0.0
    %862 = vmatpush.msra.mxu0 0.0
    %863 = vmatpush.msra.mxu0 0.0
    %864 = vmatpush.msra.mxu0 0.0
    %865 = vmatpush.msra.mxu0 0.0
    %866 = vmatpush.msra.mxu0 %v563
    %867 = vmatpush.msra.mxu0 %v562
    %868 = vmatpush.msra.mxu0 %v561
    %869 = vmatpush.msra.mxu0 %v560
    %870 = vmatmul.f32.gmra.mxu0 %v852
    %v871 = vpop.f32.mrf.mxu0
    %v872 = vadd.f32 0.0, %v871
    %873 = vdwg.mxu0
    %v875 = vrot.slane %v872, 6
    %v877 = vadd.f32 %v600, %v875
    %v878 = vmul.f32 %v877, 0.5
    %v879 = vtanh.pop %v878
    %v880 = vadd.f32 %v879, 1.0
    %v881 = vmul.f32 %v880, 0.5
    %v882 = vadd.f32 %v872, %v658
    %v884 = vrot.slane %v882, 6
    %885 = vrot.lane.b32.xlu0 %v884, 64
    %v886 = vpop.permute.xlu0 %885
    %v888 = vmul.f32 %v881, %v886
    %890 = vrot.lane.b32.xlu0 %v888, 64
    %v891 = vpop.permute.xlu0 %890
    %v893 = vadd.f32 %v600, %v891
    %v894 = vtanh.pop %v893
    %v895 = vsub.f32 1.0, %v881
    %897 = vrot.lane.b32.xlu0 %v894, 96
    %v898 = vpop.permute.xlu0 %897
    %v900 = vmul.f32 %v895, %v898
    %v901 = vrot.slane %v848, 6
    %v903 = vmul.f32 %v881, %v901
    %v904 = vadd.f32 %v900, %v903
    %v906 = vrot.slane %v904, 2
    %907 = vrot.lane.b32.xlu0 %v906, 96
    %v908 = vpop.permute.xlu0 %907
    %v909 = vsel %vm154, %v908, 0
    %911 = vmatpush.msra.mxu0 0.0
    %912 = vmatpush.msra.mxu0 0.0
    %913 = vmatpush.msra.mxu0 0.0
    %914 = vmatpush.msra.mxu0 0.0
    %915 = vmatpush.msra.mxu0 0.0
    %916 = vmatpush.msra.mxu0 0.0
    %917 = vmatpush.msra.mxu0 0.0
    %918 = vmatpush.msra.mxu0 0.0
    %919 = vmatpush.msra.mxu0 0.0
    %920 = vmatpush.msra.mxu0 0.0
    %921 = vmatpush.msra.mxu0 0.0
    %922 = vmatpush.msra.mxu0 0.0
    %923 = vmatpush.msra.mxu0 %v563
    %924 = vmatpush.msra.mxu0 %v562
    %925 = vmatpush.msra.mxu0 %v561
    %926 = vmatpush.msra.mxu0 %v560
    %927 = vmatmul.f32.gmra.mxu0 %v909
    %v928 = vpop.f32.mrf.mxu0
    %v929 = vadd.f32 0.0, %v928
    %930 = vdwg.mxu0
    %v932 = vrot.slane %v929, 4
    %v934 = vadd.f32 %v600, %v932
    %v935 = vmul.f32 %v934, 0.5
    %v936 = vtanh.pop %v935
    %v937 = vadd.f32 %v936, 1.0
    %v938 = vmul.f32 %v937, 0.5
    %v939 = vadd.f32 %v929, %v658
    %v941 = vrot.slane %v939, 4
    %942 = vrot.lane.b32.xlu0 %v941, 64
    %v943 = vpop.permute.xlu0 %942
    %v945 = vmul.f32 %v938, %v943
    %947 = vrot.lane.b32.xlu0 %v945, 64
    %v948 = vpop.permute.xlu0 %947
    %v950 = vadd.f32 %v600, %v948
    %v951 = vtanh.pop %v950
    %v952 = vsub.f32 1.0, %v938
    %954 = vrot.lane.b32.xlu0 %v951, 96
    %v955 = vpop.permute.xlu0 %954
    %v957 = vmul.f32 %v952, %v955
    %v958 = vrot.slane %v904, 6
    %v960 = vmul.f32 %v938, %v958
    %v961 = vadd.f32 %v957, %v960
    %v963 = vrot.slane %v961, 4
    %964 = vrot.lane.b32.xlu0 %v963, 96
    %v965 = vpop.permute.xlu0 %964
    %v966 = vsel %vm154, %v965, 0
    %968 = vmatpush.msra.mxu0 0.0
    %969 = vmatpush.msra.mxu0 0.0
    %970 = vmatpush.msra.mxu0 0.0
    %971 = vmatpush.msra.mxu0 0.0
    %972 = vmatpush.msra.mxu0 0.0
    %973 = vmatpush.msra.mxu0 0.0
    %974 = vmatpush.msra.mxu0 0.0
    %975 = vmatpush.msra.mxu0 0.0
    %976 = vmatpush.msra.mxu0 0.0
    %977 = vmatpush.msra.mxu0 0.0
    %978 = vmatpush.msra.mxu0 0.0
    %979 = vmatpush.msra.mxu0 0.0
    %980 = vmatpush.msra.mxu0 %v563
    %981 = vmatpush.msra.mxu0 %v562
    %982 = vmatpush.msra.mxu0 %v561
    %983 = vmatpush.msra.mxu0 %v560
    %984 = vmatmul.f32.gmra.mxu0 %v966
    %v985 = vpop.f32.mrf.mxu0
    %v986 = vadd.f32 0.0, %v985
    %987 = vdwg.mxu0
    %v989 = vrot.slane %v986, 2
    %v991 = vadd.f32 %v600, %v989
    %v992 = vmul.f32 %v991, 0.5
    %v993 = vtanh.pop %v992
    %v994 = vadd.f32 %v993, 1.0
    %v995 = vmul.f32 %v994, 0.5
    %v996 = vadd.f32 %v986, %v658
    %v998 = vrot.slane %v996, 2
    %999 = vrot.lane.b32.xlu0 %v998, 64
    %v1000 = vpop.permute.xlu0 %999
    %v1002 = vmul.f32 %v995, %v1000
    %1004 = vrot.lane.b32.xlu0 %v1002, 64
    %v1005 = vpop.permute.xlu0 %1004
    %v1007 = vadd.f32 %v600, %v1005
    %v1008 = vtanh.pop %v1007
    %v1009 = vsub.f32 1.0, %v995
    %1011 = vrot.lane.b32.xlu0 %v1008, 96
    %v1012 = vpop.permute.xlu0 %1011
    %v1014 = vmul.f32 %v1009, %v1012
    %v1015 = vrot.slane %v961, 6
    %v1017 = vmul.f32 %v995, %v1015
    %v1018 = vadd.f32 %v1014, %v1017
    %1020 = vrot.lane.b32.xlu0 %v1018, 96
    %v1021 = vpop.permute.xlu0 %1020
    %vm1023 = vcmask 261126
    %1024 = vst.msk [vmem:[#allocation7 - $0x6] sm:$0xc0] %vm1023, %v1021
    // Predicated region
    $region34: #{tpu_custom_call.1} parent=1 // pred_check
      _
    $region35: #{tpu_custom_call.1} parent=1 // pred_check_branch
      %1026 = sbr.rel (0) target = $region37
    $region36: #{tpu_custom_call.1} parent=1 // pred_region
      %1028 = vsyncadd [#allocation4], 0
      %s1030 = sshll.u32 [#allocation7], 4
      %s1031 = int_to_ptr.vmem [resolvable:$true] %s1030
      %s1032 = sshll.u32 %s6, 4
      %s1033 = int_to_ptr.hbm [resolvable:$true] %s1032
      %1035 = dma.vmem_to_hbm [thread:$0]  %s1031, 32, %s1033, [#allocation4]
    $region37: #{tpu_custom_call.1} parent=1 // pred_fallthru
      _
    // Predicated region
    $region38: #{tpu_custom_call.1} parent=1 // pred_check
      _
    $region39: #{tpu_custom_call.1} parent=1 // pred_check_branch
      %1037 = sbr.rel (0) target = $region41
    $region40: #{tpu_custom_call.1} parent=1 // pred_region
      %1039 = dma.done [#allocation4], 32
    $region41: #{tpu_custom_call.1} parent=1 // pred_fallthru
      _
    %1040 = vsyncpa [#allocation3], 1
    %1041 = vsyncpa [#allocation6], 1
    %1042 = vsyncpa [#allocation4], 1

</llo_original>
